<compile_context>
chip_gen: v5e
topology: v5e:2x2
jax: 0.10.0
libtpu: 0.0.40
codegen_flags: <defaults>
</compile_context>

<pallas_src>
import numpy as np
import jax
import jax.numpy as jnp
from jax.experimental import pallas as pl
from jax.experimental.pallas import tpu as pltpu

EPS = 1e-5          # BatchNorm eps (PyTorch default)
NEG_SLOPE = 0.2     # LeakyReLU slope


def _round_up(n, m):
    return ((n + m - 1) // m) * m


# ---------------------------------------------------------------------------
# Fused Pallas kernel: entire forward pass as dense matmuls + elementwise.
# Activations are lane-dense: batch on sublanes, channels on lanes.
# ---------------------------------------------------------------------------
def _inception_kernel(
        x_ref,
        w0lo, w0hi, bst0lo, bst0hi,          # feature_reduction (block-diag dense, split)
        w1lo, w1hi, bst1,                    # inception_1 conv a (split over h0 halves)
        w2, bst2, w3, bst3,                  # inception_1 conv b + linear
        w5x, w5h, bst5,                      # inception_2 conv a (upsample_1 folded in)
        w6, bst6, w7, bst7,                  # inception_2 conv b + linear
        w9x, w9h, bst9,                      # inception_3 conv a (upsample_2 folded in)
        w10, bst10, w11, bst11,              # inception_3 conv b + linear
        w12a, w12b, w12c, b12,               # union linear (split over cat(x1,x2,x3))
        out_ref):
    cdt = w0lo.dtype      # matmul operand dtype (f32 or bf16); accumulation f32

    def dot(a, w_ref):
        return jnp.dot(a, w_ref[...], preferred_element_type=jnp.float32)

    def act_bn(z, bst_ref):                  # all elementwise math kept in f32
        z = z + bst_ref[0:1, :]              # conv/linear bias
        z = jnp.maximum(z, NEG_SLOPE * z)    # LeakyReLU(0.2)
        return z * bst_ref[1:2, :] + bst_ref[2:3, :]   # folded eval-mode BN

    x = x_ref[...].astype(cdt)                         # (TB, F*L)

    # feature_reduction (grouped conv as block-diagonal dense), two halves
    h0_lo = act_bn(dot(x, w0lo), bst0lo).astype(cdt)   # (TB, L)
    h0_hi = act_bn(dot(x, w0hi), bst0hi).astype(cdt)   # (TB, L)

    # inception_1
    a = act_bn(dot(h0_lo, w1lo) + dot(h0_hi, w1hi), bst1).astype(cdt)   # (TB, L)
    a = act_bn(dot(a, w2), bst2).astype(cdt)                            # (TB, L/2)
    x1 = act_bn(dot(a, w3), bst3).astype(cdt)                           # (TB, L/8)

    # inception_2 (upsample_1 folded into w5x; concat -> split matmul on h0_hi)
    a = act_bn(dot(x1, w5x) + dot(h0_hi, w5h), bst5).astype(cdt)        # (TB, L/2)
    a = act_bn(dot(a, w6), bst6).astype(cdt)                            # (TB, L/4)
    x2 = act_bn(dot(a, w7), bst7).astype(cdt)                           # (TB, L/16)

    # inception_3 (upsample_2 folded into w9x; h0 part uses top half of h0_hi)
    a = act_bn(dot(x2, w9x) + dot(h0_hi, w9h), bst9).astype(cdt)        # (TB, L/4)
    a = act_bn(dot(a, w10), bst10).astype(cdt)                          # (TB, L/8)
    x3 = act_bn(dot(a, w11), bst11).astype(cdt)                         # (TB, L/32)

    # union Linear over cat(x1, x2, x3) -> three split (accumulating) matmuls
    out = dot(x1, w12a) + dot(x2, w12b) + dot(x3, w12c) + b12[...]
    out_ref[...] = out.astype(out_ref.dtype)


# ---------------------------------------------------------------------------
# Module wrapper: parameter init (PyTorch layouts), host-side packing, forward.
# ---------------------------------------------------------------------------
class DeepConvolutionalClassifierInceptionBranch3NoEncBigBottleneckComposed:

    def __init__(self, lag_size, prediction_size, number_features, device, key=None):
        assert lag_size % 32 == 0, "lag_size must be divisible by 32"
        self.lag_size = lag_size
        self.prediction_size = prediction_size
        self.number_features = number_features
        self.device = device
        self._p_pad = _round_up(prediction_size, 128)   # lane-dense output
        if key is None:
            key = jax.random.PRNGKey(0)
        self.params = self._init_params(key)            # PyTorch-layout numpy params
        # Kernel-layout parameter sets (bf16 matmul operands by default; f32
        # kept around for tight numerical validation of the packing).
        self._kparams = {
            'float32': self._pack(self.params, jnp.float32),
            'bfloat16': self._pack(self.params, jnp.bfloat16),
        }

    # ---- parameter initialization (PyTorch tensor layouts, numpy) ----------
    def _init_params(self, key):
        L, F, P = self.lag_size, self.number_features, self.prediction_size
        keys = iter(jax.random.split(key, 100))

        def normal(shape, scale):
            return np.asarray(jax.random.normal(next(keys), shape,
                                                dtype=jnp.float32)) * scale

        def uniform(shape, lo, hi):
            return np.asarray(jax.random.uniform(next(keys), shape,
                                                 dtype=jnp.float32,
                                                 minval=lo, maxval=hi))

        def conv(out_c, in_c, k):
            return {'w': normal((out_c, in_c, k), 1.0 / np.sqrt(in_c * k)),
                    'b': normal((out_c,), 0.05)}

        def linear(out_c, in_c):
            return {'w': normal((out_c, in_c), 1.0 / np.sqrt(in_c)),
                    'b': normal((out_c,), 0.05)}

        def bn(c):
            return {'g': uniform((c,), 0.8, 1.2), 'b': normal((c,), 0.05),
                    'm': normal((c,), 0.05), 'v': uniform((c,), 0.5, 1.5)}

        return {
            'fr':  conv(2 * L, 1, F),                'fr_bn':  bn(2 * L),
            'i1a': conv(L, 2 * L, 1),                'i1a_bn': bn(L),
            'i1b': conv(L // 2, L, 1),               'i1b_bn': bn(L // 2),
            'i1c': linear(L // 8, L // 2),           'i1c_bn': bn(L // 8),
            'u1':  conv(L // 2, L // 8, 1),
            'i2a': conv(L // 2, L + L // 2, 1),      'i2a_bn': bn(L // 2),
            'i2b': conv(L // 4, L // 2, 1),          'i2b_bn': bn(L // 4),
            'i2c': linear(L // 16, L // 4),          'i2c_bn': bn(L // 16),
            'u2':  conv(L // 4, L // 16, 1),
            'i3a': conv(L // 4, L // 2 + L // 4, 1), 'i3a_bn': bn(L // 4),
            'i3b': conv(L // 8, L // 4, 1),          'i3b_bn': bn(L // 8),
            'i3c': linear(L // 32, L // 8),          'i3c_bn': bn(L // 32),
            'un':  linear(P, L // 8 + L // 16 + L // 32),
        }

    # ---- host-side packing into kernel layout -------------------------------
    def _pack(self, p, compute_dtype):
        L, F, P = self.lag_size, self.number_features, self.prediction_size
        Ppad = self._p_pad
        f64 = np.float64

        def fold_bn(bias, bn_d):            # (bias, scale, shift) -> (3, C)
            s = bn_d['g'].astype(f64) / np.sqrt(bn_d['v'].astype(f64) + EPS)
            t = bn_d['b'].astype(f64) - bn_d['m'].astype(f64) * s
            return np.stack([np.asarray(bias, f64), s, t], axis=0)

        def cw(d):                          # 1x1-conv weight (out,in,1) -> (in,out)
            return np.asarray(d['w'][:, :, 0].T, f64)

        def lw(d):                          # linear weight (out,in) -> (in,out)
            return np.asarray(d['w'].T, f64)

        # feature_reduction: grouped conv expanded to block-diagonal dense with
        # rows permuted for the F-major flatten of x (no wrapper transpose):
        #   W0[f*L + c, o] = w_fr[o, 0, f]  for c == o // 2
        wfr = np.asarray(p['fr']['w'], f64)                     # (2L, 1, F)
        W0 = np.zeros((F, L, 2 * L), f64)
        o = np.arange(2 * L)
        W0[:, o // 2, o] = wfr[o, 0, :].T
        W0 = W0.reshape(F * L, 2 * L)
        W0_lo, W0_hi = W0[:, :L], W0[:, L:]
        bst0 = fold_bn(p['fr']['b'], p['fr_bn'])
        bst0_lo, bst0_hi = bst0[:, :L], bst0[:, L:]

        # inception_1 (first conv split over the two h0 halves)
        W1 = cw(p['i1a'])                                       # (2L, L)
        W1_lo, W1_hi = W1[:L], W1[L:]
        bst1 = fold_bn(p['i1a']['b'], p['i1a_bn'])
        W2 = cw(p['i1b']); bst2 = fold_bn(p['i1b']['b'], p['i1b_bn'])
        W3 = lw(p['i1c']); bst3 = fold_bn(p['i1c']['b'], p['i1c_bn'])

        # inception_2 'a': upsample_1 folded in, concat split into two matmuls
        W4 = cw(p['u1']); b4 = np.asarray(p['u1']['b'], f64)    # (L/8, L/2)
        W5 = cw(p['i2a'])                                       # (3L/2, L/2)
        W5a, W5h = W5[:L // 2], W5[L // 2:]                     # x1u part / h0_hi part
        W5x = W4 @ W5a                                          # folded (L/8, L/2)
        b5 = np.asarray(p['i2a']['b'], f64) + b4 @ W5a
        bst5 = fold_bn(b5, p['i2a_bn'])
        W6 = cw(p['i2b']); bst6 = fold_bn(p['i2b']['b'], p['i2b_bn'])
        W7 = lw(p['i2c']); bst7 = fold_bn(p['i2c']['b'], p['i2c_bn'])

        # inception_3 'a': upsample_2 folded in; only the top half of h0_hi is
        # used, so the unused L/2 rows of W9h are zero (trimmed slab).
        W8 = cw(p['u2']); b8 = np.asarray(p['u2']['b'], f64)    # (L/16, L/4)
        W9 = cw(p['i3a'])                                       # (3L/4, L/4)
        W9a = W9[:L // 4]
        W9x = W8 @ W9a                                          # folded (L/16, L/4)
        b9 = np.asarray(p['i3a']['b'], f64) + b8 @ W9a
        W9h = np.zeros((L, L // 4), f64)
        W9h[L // 2:] = W9[L // 4:]                              # h0[:, 3L/2:] part
        bst9 = fold_bn(b9, p['i3a_bn'])
        W10 = cw(p['i3b']); bst10 = fold_bn(p['i3b']['b'], p['i3b_bn'])
        W11 = lw(p['i3c']); bst11 = fold_bn(p['i3c']['b'], p['i3c_bn'])

        # union Linear over cat(x1, x2, x3): split matmuls, output lane-padded
        Wun = np.asarray(p['un']['w'], f64)                     # (P, L/8+L/16+L/32)
        s1, s2 = L // 8, L // 8 + L // 16
        W12a = np.zeros((L // 8, Ppad), f64);  W12a[:, :P] = Wun[:, :s1].T
        W12b = np.zeros((L // 16, Ppad), f64); W12b[:, :P] = Wun[:, s1:s2].T
        W12c = np.zeros((L // 32, Ppad), f64); W12c[:, :P] = Wun[:, s2:].T
        b12 = np.zeros((1, Ppad), f64);        b12[0, :P] = p['un']['b']

        packed = [
            (W0_lo, True), (W0_hi, True), (bst0_lo, False), (bst0_hi, False),
            (W1_lo, True), (W1_hi, True), (bst1, False),
            (W2, True), (bst2, False), (W3, True), (bst3, False),
            (W5x, True), (W5h, True), (bst5, False),
            (W6, True), (bst6, False), (W7, True), (bst7, False),
            (W9x, True), (W9h, True), (bst9, False),
            (W10, True), (bst10, False), (W11, True), (bst11, False),
            (W12a, True), (W12b, True), (W12c, True), (b12, False),
        ]
        # matmul weights -> compute dtype; bias/scale/shift tables stay f32
        return [jnp.asarray(a, compute_dtype if is_mat else jnp.float32)
                for a, is_mat in packed]

    # ---- forward -------------------------------------------------------------
    def forward(self, x, y=None, compute_dtype=jnp.bfloat16):
        L, F, P = self.lag_size, self.number_features, self.prediction_size
        params = self._kparams[jnp.dtype(compute_dtype).name]
        x = jnp.asarray(x, jnp.float32)
        B = x.shape[0]
        assert x.shape[1] == F and x.shape[2] == L, \
            "expected input (B, number_features, lag_size)"
        # F-major flatten (pure reshape, no transpose); W0 rows are permuted
        # host-side to match, so no extra HBM round-trip before the kernel.
        x_flat = x.reshape(B, F * L)

        # Batch tile: fill MXU rows for large B, avoid padding for tiny B.
        if B >= 256:
            TB = 256
        elif B >= 128:
            TB = 128
        else:
            TB = _round_up(B, 8)
        Bp = _round_up(B, TB)
        if Bp != B:
            x_flat = jnp.pad(x_flat, ((0, Bp - B), (0, 0)))

        FL = F * L
        Ppad = self._p_pad
        in_specs = [pl.BlockSpec((TB, FL), lambda i: (i, 0))]
        # Constant index maps -> weights/tables DMA'd once, VMEM-resident.
        in_specs += [pl.BlockSpec(a.shape, lambda i: (0, 0)) for a in params]

        out = pl.pallas_call(
            _inception_kernel,
            grid=(Bp // TB,),
            in_specs=in_specs,
            out_specs=pl.BlockSpec((TB, Ppad), lambda i: (i, 0)),
            out_shape=jax.ShapeDtypeStruct((Bp, Ppad), jnp.float32),
            compiler_params=pltpu.CompilerParams(
                dimension_semantics=("parallel",)),
        )(x_flat, *params)
        return out[:B, :P]

    def predict(self, x):
        return self.forward(x, None)


# ---------------------------------------------------------------------------
# Pure-numpy reference mirroring the PyTorch forward (eval-mode BatchNorm).
# ---------------------------------------------------------------------------
def reference_forward(x, p, L, F, P):
    x = np.asarray(x, np.float64)
    B = x.shape[0]

    def leaky(z):
        return np.where(z >= 0.0, z, NEG_SLOPE * z)

    def bn(z, d):
        return d['g'] * (z - d['m']) / np.sqrt(d['v'] + EPS) + d['b']

    def conv1(z, d):       # 1x1 conv on a length-1 signal == dense
        return z @ d['w'][:, :, 0].T + d['b']

    def lin(z, d):
        return z @ d['w'].T + d['b']

    xt = np.transpose(x, (0, 2, 1))                          # (B, L, F)
    wg = p['fr']['w'].reshape(L, 2, F)
    h0 = np.einsum('blf,ljf->blj', xt, wg).reshape(B, 2 * L) + p['fr']['b']
    h0 = bn(leaky(h0), p['fr_bn'])

    a = bn(leaky(conv1(h0, p['i1a'])), p['i1a_bn'])
    a = bn(leaky(conv1(a, p['i1b'])), p['i1b_bn'])
    x1 = bn(leaky(lin(a, p['i1c'])), p['i1c_bn'])

    x1u = conv1(x1, p['u1'])
    x2in = np.concatenate([x1u, h0[:, -L:]], axis=1)
    a = bn(leaky(conv1(x2in, p['i2a'])), p['i2a_bn'])
    a = bn(leaky(conv1(a, p['i2b'])), p['i2b_bn'])
    x2 = bn(leaky(lin(a, p['i2c'])), p['i2c_bn'])

    x2u = conv1(x2, p['u2'])
    x3in = np.concatenate([x2u, h0[:, -(L // 2):]], axis=1)
    a = bn(leaky(conv1(x3in, p['i3a'])), p['i3a_bn'])
    a = bn(leaky(conv1(a, p['i3b'])), p['i3b_bn'])
    x3 = bn(leaky(lin(a, p['i3c'])), p['i3c_bn'])

    feats = np.concatenate([x1, x2, x3], axis=1)
    return lin(feats, p['un'])


if __name__ == "__main__":
    L, P, F, B = 64, 16, 4, 8
    key = jax.random.PRNGKey(0)
    k_model, k_x = jax.random.split(key)

    model = DeepConvolutionalClassifierInceptionBranch3NoEncBigBottleneckComposed(
        lag_size=L, prediction_size=P, number_features=F, device="tpu", key=k_model)

    x = jax.random.normal(k_x, (B, F, L), dtype=jnp.float32)
    ref = reference_forward(np.asarray(x), model.params, L, F, P)

    # f32 matmul path: tight tolerance so any weight-packing / permutation /
    # folding bug is caught (errors from such bugs are O(0.1-1)).
    out32 = jax.block_until_ready(model.forward(x, compute_dtype=jnp.float32))
    assert out32.shape == (B, P)
    np.testing.assert_allclose(np.asarray(out32, np.float64), ref,
                               rtol=5e-4, atol=5e-4)

    # default bf16 matmul-operand path: loose tolerance for bf16 rounding
    # through the ~11-matmul chain (elementwise math stays f32).
    out_bf = jax.block_until_ready(model.predict(x))
    assert out_bf.shape == (B, P)
    np.testing.assert_allclose(np.asarray(out_bf, np.float64), ref,
                               rtol=6e-2, atol=6e-2)

    print("KERNEL_OK")
</pallas_src>

<mosaic_0001>
module attributes {stable_mosaic.version = 11 : i64} {
  func.func @_inception_kernel(%arg0: i32, %arg1: memref<8x256xf32, #tpu.memory_space<vmem>>, %arg2: memref<256x64xf32, #tpu.memory_space<vmem>>, %arg3: memref<256x64xf32, #tpu.memory_space<vmem>>, %arg4: memref<3x64xf32, #tpu.memory_space<vmem>>, %arg5: memref<3x64xf32, #tpu.memory_space<vmem>>, %arg6: memref<64x64xf32, #tpu.memory_space<vmem>>, %arg7: memref<64x64xf32, #tpu.memory_space<vmem>>, %arg8: memref<3x64xf32, #tpu.memory_space<vmem>>, %arg9: memref<64x32xf32, #tpu.memory_space<vmem>>, %arg10: memref<3x32xf32, #tpu.memory_space<vmem>>, %arg11: memref<32x8xf32, #tpu.memory_space<vmem>>, %arg12: memref<3x8xf32, #tpu.memory_space<vmem>>, %arg13: memref<8x32xf32, #tpu.memory_space<vmem>>, %arg14: memref<64x32xf32, #tpu.memory_space<vmem>>, %arg15: memref<3x32xf32, #tpu.memory_space<vmem>>, %arg16: memref<32x16xf32, #tpu.memory_space<vmem>>, %arg17: memref<3x16xf32, #tpu.memory_space<vmem>>, %arg18: memref<16x4xf32, #tpu.memory_space<vmem>>, %arg19: memref<3x4xf32, #tpu.memory_space<vmem>>, %arg20: memref<4x16xf32, #tpu.memory_space<vmem>>, %arg21: memref<64x16xf32, #tpu.memory_space<vmem>>, %arg22: memref<3x16xf32, #tpu.memory_space<vmem>>, %arg23: memref<16x8xf32, #tpu.memory_space<vmem>>, %arg24: memref<3x8xf32, #tpu.memory_space<vmem>>, %arg25: memref<8x2xf32, #tpu.memory_space<vmem>>, %arg26: memref<3x2xf32, #tpu.memory_space<vmem>>, %arg27: memref<8x128xf32, #tpu.memory_space<vmem>>, %arg28: memref<4x128xf32, #tpu.memory_space<vmem>>, %arg29: memref<2x128xf32, #tpu.memory_space<vmem>>, %arg30: memref<1x128xf32, #tpu.memory_space<vmem>>, %arg31: memref<8x128xf32, #tpu.memory_space<vmem>>) attributes {dimension_semantics = [#tpu.dimension_semantics<parallel>], iteration_bounds = array<i64: 1>, scalar_prefetch = 0 : i64, scratch_operands = 0 : i64, tpu.core_type = #tpu.core_type<tc>, window_params = [{transform_indices = @transform_0, window_bounds = array<i64: 8, 256>}, {pipeline_mode = #tpu.pipeline_mode<synchronous>, transform_indices = @transform_1, window_bounds = array<i64: 256, 64>}, {pipeline_mode = #tpu.pipeline_mode<synchronous>, transform_indices = @transform_2, window_bounds = array<i64: 256, 64>}, {pipeline_mode = #tpu.pipeline_mode<synchronous>, transform_indices = @transform_3, window_bounds = array<i64: 3, 64>}, {pipeline_mode = #tpu.pipeline_mode<synchronous>, transform_indices = @transform_4, window_bounds = array<i64: 3, 64>}, {pipeline_mode = #tpu.pipeline_mode<synchronous>, transform_indices = @transform_5, window_bounds = array<i64: 64, 64>}, {pipeline_mode = #tpu.pipeline_mode<synchronous>, transform_indices = @transform_6, window_bounds = array<i64: 64, 64>}, {pipeline_mode = #tpu.pipeline_mode<synchronous>, transform_indices = @transform_7, window_bounds = array<i64: 3, 64>}, {pipeline_mode = #tpu.pipeline_mode<synchronous>, transform_indices = @transform_8, window_bounds = array<i64: 64, 32>}, {pipeline_mode = #tpu.pipeline_mode<synchronous>, transform_indices = @transform_9, window_bounds = array<i64: 3, 32>}, {pipeline_mode = #tpu.pipeline_mode<synchronous>, transform_indices = @transform_10, window_bounds = array<i64: 32, 8>}, {pipeline_mode = #tpu.pipeline_mode<synchronous>, transform_indices = @transform_11, window_bounds = array<i64: 3, 8>}, {pipeline_mode = #tpu.pipeline_mode<synchronous>, transform_indices = @transform_12, window_bounds = array<i64: 8, 32>}, {pipeline_mode = #tpu.pipeline_mode<synchronous>, transform_indices = @transform_13, window_bounds = array<i64: 64, 32>}, {pipeline_mode = #tpu.pipeline_mode<synchronous>, transform_indices = @transform_14, window_bounds = array<i64: 3, 32>}, {pipeline_mode = #tpu.pipeline_mode<synchronous>, transform_indices = @transform_15, window_bounds = array<i64: 32, 16>}, {pipeline_mode = #tpu.pipeline_mode<synchronous>, transform_indices = @transform_16, window_bounds = array<i64: 3, 16>}, {pipeline_mode = #tpu.pipeline_mode<synchronous>, transform_indices = @transform_17, window_bounds = array<i64: 16, 4>}, {pipeline_mode = #tpu.pipeline_mode<synchronous>, transform_indices = @transform_18, window_bounds = array<i64: 3, 4>}, {pipeline_mode = #tpu.pipeline_mode<synchronous>, transform_indices = @transform_19, window_bounds = array<i64: 4, 16>}, {pipeline_mode = #tpu.pipeline_mode<synchronous>, transform_indices = @transform_20, window_bounds = array<i64: 64, 16>}, {pipeline_mode = #tpu.pipeline_mode<synchronous>, transform_indices = @transform_21, window_bounds = array<i64: 3, 16>}, {pipeline_mode = #tpu.pipeline_mode<synchronous>, transform_indices = @transform_22, window_bounds = array<i64: 16, 8>}, {pipeline_mode = #tpu.pipeline_mode<synchronous>, transform_indices = @transform_23, window_bounds = array<i64: 3, 8>}, {pipeline_mode = #tpu.pipeline_mode<synchronous>, transform_indices = @transform_24, window_bounds = array<i64: 8, 2>}, {pipeline_mode = #tpu.pipeline_mode<synchronous>, transform_indices = @transform_25, window_bounds = array<i64: 3, 2>}, {pipeline_mode = #tpu.pipeline_mode<synchronous>, transform_indices = @transform_26, window_bounds = array<i64: 8, 128>}, {pipeline_mode = #tpu.pipeline_mode<synchronous>, transform_indices = @transform_27, window_bounds = array<i64: 4, 128>}, {pipeline_mode = #tpu.pipeline_mode<synchronous>, transform_indices = @transform_28, window_bounds = array<i64: 2, 128>}, {pipeline_mode = #tpu.pipeline_mode<synchronous>, transform_indices = @transform_29, window_bounds = array<i64: 1, 128>}, {transform_indices = @transform_30, window_bounds = array<i64: 8, 128>}]} {
    %c0 = arith.constant 0 : index
    %c0_0 = arith.constant 0 : index
    %0 = vector.load %arg1[%c0, %c0_0] : memref<8x256xf32, #tpu.memory_space<vmem>>, vector<8x256xf32>
    %c0_1 = arith.constant 0 : index
    %c0_2 = arith.constant 0 : index
    %1 = vector.load %arg2[%c0_1, %c0_2] : memref<256x64xf32, #tpu.memory_space<vmem>>, vector<256x64xf32>
    %cst = arith.constant dense<0.000000e+00> : vector<8x64xf32>
    %2 = tpu.matmul %0, %1, %cst {dimension_numbers = #tpu.dot_dimension_numbers<[1], [0], [0], [1], [0, 0, 1, 1], [], []>} : vector<8x256xf32>, vector<256x64xf32>, vector<8x64xf32> -> vector<8x64xf32>
    %c0_3 = arith.constant 0 : index
    %c0_4 = arith.constant 0 : index
    %3 = vector.load %arg4[%c0_3, %c0_4] : memref<3x64xf32, #tpu.memory_space<vmem>>, vector<1x64xf32>
    %4 = vector.broadcast %3 : vector<1x64xf32> to vector<8x64xf32>
    %5 = arith.addf %2, %4 : vector<8x64xf32>
    %cst_5 = arith.constant 2.000000e-01 : f32
    %6 = vector.broadcast %cst_5 : f32 to vector<8x64xf32>
    %7 = arith.mulf %6, %5 : vector<8x64xf32>
    %8 = arith.maximumf %5, %7 : vector<8x64xf32>
    %c1 = arith.constant 1 : index
    %c0_6 = arith.constant 0 : index
    %9 = vector.load %arg4[%c1, %c0_6] : memref<3x64xf32, #tpu.memory_space<vmem>>, vector<1x64xf32>
    %10 = vector.broadcast %9 : vector<1x64xf32> to vector<8x64xf32>
    %11 = arith.mulf %8, %10 : vector<8x64xf32>
    %c2 = arith.constant 2 : index
    %c0_7 = arith.constant 0 : index
    %12 = vector.load %arg4[%c2, %c0_7] : memref<3x64xf32, #tpu.memory_space<vmem>>, vector<1x64xf32>
    %13 = vector.broadcast %12 : vector<1x64xf32> to vector<8x64xf32>
    %14 = arith.addf %11, %13 : vector<8x64xf32>
    %c0_8 = arith.constant 0 : index
    %c0_9 = arith.constant 0 : index
    %15 = vector.load %arg3[%c0_8, %c0_9] : memref<256x64xf32, #tpu.memory_space<vmem>>, vector<256x64xf32>
    %cst_10 = arith.constant dense<0.000000e+00> : vector<8x64xf32>
    %16 = tpu.matmul %0, %15, %cst_10 {dimension_numbers = #tpu.dot_dimension_numbers<[1], [0], [0], [1], [0, 0, 1, 1], [], []>} : vector<8x256xf32>, vector<256x64xf32>, vector<8x64xf32> -> vector<8x64xf32>
    %c0_11 = arith.constant 0 : index
    %c0_12 = arith.constant 0 : index
    %17 = vector.load %arg5[%c0_11, %c0_12] : memref<3x64xf32, #tpu.memory_space<vmem>>, vector<1x64xf32>
    %18 = vector.broadcast %17 : vector<1x64xf32> to vector<8x64xf32>
    %19 = arith.addf %16, %18 : vector<8x64xf32>
    %cst_13 = arith.constant 2.000000e-01 : f32
    %20 = vector.broadcast %cst_13 : f32 to vector<8x64xf32>
    %21 = arith.mulf %20, %19 : vector<8x64xf32>
    %22 = arith.maximumf %19, %21 : vector<8x64xf32>
    %c1_14 = arith.constant 1 : index
    %c0_15 = arith.constant 0 : index
    %23 = vector.load %arg5[%c1_14, %c0_15] : memref<3x64xf32, #tpu.memory_space<vmem>>, vector<1x64xf32>
    %24 = vector.broadcast %23 : vector<1x64xf32> to vector<8x64xf32>
    %25 = arith.mulf %22, %24 : vector<8x64xf32>
    %c2_16 = arith.constant 2 : index
    %c0_17 = arith.constant 0 : index
    %26 = vector.load %arg5[%c2_16, %c0_17] : memref<3x64xf32, #tpu.memory_space<vmem>>, vector<1x64xf32>
    %27 = vector.broadcast %26 : vector<1x64xf32> to vector<8x64xf32>
    %28 = arith.addf %25, %27 : vector<8x64xf32>
    %c0_18 = arith.constant 0 : index
    %c0_19 = arith.constant 0 : index
    %29 = vector.load %arg6[%c0_18, %c0_19] : memref<64x64xf32, #tpu.memory_space<vmem>>, vector<64x64xf32>
    %cst_20 = arith.constant dense<0.000000e+00> : vector<8x64xf32>
    %30 = tpu.matmul %14, %29, %cst_20 {dimension_numbers = #tpu.dot_dimension_numbers<[1], [0], [0], [1], [0, 0, 1, 1], [], []>} : vector<8x64xf32>, vector<64x64xf32>, vector<8x64xf32> -> vector<8x64xf32>
    %c0_21 = arith.constant 0 : index
    %c0_22 = arith.constant 0 : index
    %31 = vector.load %arg7[%c0_21, %c0_22] : memref<64x64xf32, #tpu.memory_space<vmem>>, vector<64x64xf32>
    %cst_23 = arith.constant dense<0.000000e+00> : vector<8x64xf32>
    %32 = tpu.matmul %28, %31, %cst_23 {dimension_numbers = #tpu.dot_dimension_numbers<[1], [0], [0], [1], [0, 0, 1, 1], [], []>} : vector<8x64xf32>, vector<64x64xf32>, vector<8x64xf32> -> vector<8x64xf32>
    %33 = arith.addf %30, %32 : vector<8x64xf32>
    %c0_24 = arith.constant 0 : index
    %c0_25 = arith.constant 0 : index
    %34 = vector.load %arg8[%c0_24, %c0_25] : memref<3x64xf32, #tpu.memory_space<vmem>>, vector<1x64xf32>
    %35 = vector.broadcast %34 : vector<1x64xf32> to vector<8x64xf32>
    %36 = arith.addf %33, %35 : vector<8x64xf32>
    %cst_26 = arith.constant 2.000000e-01 : f32
    %37 = vector.broadcast %cst_26 : f32 to vector<8x64xf32>
    %38 = arith.mulf %37, %36 : vector<8x64xf32>
    %39 = arith.maximumf %36, %38 : vector<8x64xf32>
    %c1_27 = arith.constant 1 : index
    %c0_28 = arith.constant 0 : index
    %40 = vector.load %arg8[%c1_27, %c0_28] : memref<3x64xf32, #tpu.memory_space<vmem>>, vector<1x64xf32>
    %41 = vector.broadcast %40 : vector<1x64xf32> to vector<8x64xf32>
    %42 = arith.mulf %39, %41 : vector<8x64xf32>
    %c2_29 = arith.constant 2 : index
    %c0_30 = arith.constant 0 : index
    %43 = vector.load %arg8[%c2_29, %c0_30] : memref<3x64xf32, #tpu.memory_space<vmem>>, vector<1x64xf32>
    %44 = vector.broadcast %43 : vector<1x64xf32> to vector<8x64xf32>
    %45 = arith.addf %42, %44 : vector<8x64xf32>
    %c0_31 = arith.constant 0 : index
    %c0_32 = arith.constant 0 : index
    %46 = vector.load %arg9[%c0_31, %c0_32] : memref<64x32xf32, #tpu.memory_space<vmem>>, vector<64x32xf32>
    %cst_33 = arith.constant dense<0.000000e+00> : vector<8x32xf32>
    %47 = tpu.matmul %45, %46, %cst_33 {dimension_numbers = #tpu.dot_dimension_numbers<[1], [0], [0], [1], [0, 0, 1, 1], [], []>} : vector<8x64xf32>, vector<64x32xf32>, vector<8x32xf32> -> vector<8x32xf32>
    %c0_34 = arith.constant 0 : index
    %c0_35 = arith.constant 0 : index
    %48 = vector.load %arg10[%c0_34, %c0_35] : memref<3x32xf32, #tpu.memory_space<vmem>>, vector<1x32xf32>
    %49 = vector.broadcast %48 : vector<1x32xf32> to vector<8x32xf32>
    %50 = arith.addf %47, %49 : vector<8x32xf32>
    %cst_36 = arith.constant 2.000000e-01 : f32
    %51 = vector.broadcast %cst_36 : f32 to vector<8x32xf32>
    %52 = arith.mulf %51, %50 : vector<8x32xf32>
    %53 = arith.maximumf %50, %52 : vector<8x32xf32>
    %c1_37 = arith.constant 1 : index
    %c0_38 = arith.constant 0 : index
    %54 = vector.load %arg10[%c1_37, %c0_38] : memref<3x32xf32, #tpu.memory_space<vmem>>, vector<1x32xf32>
    %55 = vector.broadcast %54 : vector<1x32xf32> to vector<8x32xf32>
    %56 = arith.mulf %53, %55 : vector<8x32xf32>
    %c2_39 = arith.constant 2 : index
    %c0_40 = arith.constant 0 : index
    %57 = vector.load %arg10[%c2_39, %c0_40] : memref<3x32xf32, #tpu.memory_space<vmem>>, vector<1x32xf32>
    %58 = vector.broadcast %57 : vector<1x32xf32> to vector<8x32xf32>
    %59 = arith.addf %56, %58 : vector<8x32xf32>
    %c0_41 = arith.constant 0 : index
    %c0_42 = arith.constant 0 : index
    %60 = vector.load %arg11[%c0_41, %c0_42] : memref<32x8xf32, #tpu.memory_space<vmem>>, vector<32x8xf32>
    %cst_43 = arith.constant dense<0.000000e+00> : vector<8x8xf32>
    %61 = tpu.matmul %59, %60, %cst_43 {dimension_numbers = #tpu.dot_dimension_numbers<[1], [0], [0], [1], [0, 0, 1, 1], [], []>} : vector<8x32xf32>, vector<32x8xf32>, vector<8x8xf32> -> vector<8x8xf32>
    %c0_44 = arith.constant 0 : index
    %c0_45 = arith.constant 0 : index
    %62 = vector.load %arg12[%c0_44, %c0_45] : memref<3x8xf32, #tpu.memory_space<vmem>>, vector<1x8xf32>
    %63 = vector.broadcast %62 : vector<1x8xf32> to vector<8x8xf32>
    %64 = arith.addf %61, %63 : vector<8x8xf32>
    %cst_46 = arith.constant 2.000000e-01 : f32
    %65 = vector.broadcast %cst_46 : f32 to vector<8x8xf32>
    %66 = arith.mulf %65, %64 : vector<8x8xf32>
    %67 = arith.maximumf %64, %66 : vector<8x8xf32>
    %c1_47 = arith.constant 1 : index
    %c0_48 = arith.constant 0 : index
    %68 = vector.load %arg12[%c1_47, %c0_48] : memref<3x8xf32, #tpu.memory_space<vmem>>, vector<1x8xf32>
    %69 = vector.broadcast %68 : vector<1x8xf32> to vector<8x8xf32>
    %70 = arith.mulf %67, %69 : vector<8x8xf32>
    %c2_49 = arith.constant 2 : index
    %c0_50 = arith.constant 0 : index
    %71 = vector.load %arg12[%c2_49, %c0_50] : memref<3x8xf32, #tpu.memory_space<vmem>>, vector<1x8xf32>
    %72 = vector.broadcast %71 : vector<1x8xf32> to vector<8x8xf32>
    %73 = arith.addf %70, %72 : vector<8x8xf32>
    %c0_51 = arith.constant 0 : index
    %c0_52 = arith.constant 0 : index
    %74 = vector.load %arg13[%c0_51, %c0_52] : memref<8x32xf32, #tpu.memory_space<vmem>>, vector<8x32xf32>
    %cst_53 = arith.constant dense<0.000000e+00> : vector<8x32xf32>
    %75 = tpu.matmul %73, %74, %cst_53 {dimension_numbers = #tpu.dot_dimension_numbers<[1], [0], [0], [1], [0, 0, 1, 1], [], []>} : vector<8x8xf32>, vector<8x32xf32>, vector<8x32xf32> -> vector<8x32xf32>
    %c0_54 = arith.constant 0 : index
    %c0_55 = arith.constant 0 : index
    %76 = vector.load %arg14[%c0_54, %c0_55] : memref<64x32xf32, #tpu.memory_space<vmem>>, vector<64x32xf32>
    %cst_56 = arith.constant dense<0.000000e+00> : vector<8x32xf32>
    %77 = tpu.matmul %28, %76, %cst_56 {dimension_numbers = #tpu.dot_dimension_numbers<[1], [0], [0], [1], [0, 0, 1, 1], [], []>} : vector<8x64xf32>, vector<64x32xf32>, vector<8x32xf32> -> vector<8x32xf32>
    %78 = arith.addf %75, %77 : vector<8x32xf32>
    %c0_57 = arith.constant 0 : index
    %c0_58 = arith.constant 0 : index
    %79 = vector.load %arg15[%c0_57, %c0_58] : memref<3x32xf32, #tpu.memory_space<vmem>>, vector<1x32xf32>
    %80 = vector.broadcast %79 : vector<1x32xf32> to vector<8x32xf32>
    %81 = arith.addf %78, %80 : vector<8x32xf32>
    %cst_59 = arith.constant 2.000000e-01 : f32
    %82 = vector.broadcast %cst_59 : f32 to vector<8x32xf32>
    %83 = arith.mulf %82, %81 : vector<8x32xf32>
    %84 = arith.maximumf %81, %83 : vector<8x32xf32>
    %c1_60 = arith.constant 1 : index
    %c0_61 = arith.constant 0 : index
    %85 = vector.load %arg15[%c1_60, %c0_61] : memref<3x32xf32, #tpu.memory_space<vmem>>, vector<1x32xf32>
    %86 = vector.broadcast %85 : vector<1x32xf32> to vector<8x32xf32>
    %87 = arith.mulf %84, %86 : vector<8x32xf32>
    %c2_62 = arith.constant 2 : index
    %c0_63 = arith.constant 0 : index
    %88 = vector.load %arg15[%c2_62, %c0_63] : memref<3x32xf32, #tpu.memory_space<vmem>>, vector<1x32xf32>
    %89 = vector.broadcast %88 : vector<1x32xf32> to vector<8x32xf32>
    %90 = arith.addf %87, %89 : vector<8x32xf32>
    %c0_64 = arith.constant 0 : index
    %c0_65 = arith.constant 0 : index
    %91 = vector.load %arg16[%c0_64, %c0_65] : memref<32x16xf32, #tpu.memory_space<vmem>>, vector<32x16xf32>
    %cst_66 = arith.constant dense<0.000000e+00> : vector<8x16xf32>
    %92 = tpu.matmul %90, %91, %cst_66 {dimension_numbers = #tpu.dot_dimension_numbers<[1], [0], [0], [1], [0, 0, 1, 1], [], []>} : vector<8x32xf32>, vector<32x16xf32>, vector<8x16xf32> -> vector<8x16xf32>
    %c0_67 = arith.constant 0 : index
    %c0_68 = arith.constant 0 : index
    %93 = vector.load %arg17[%c0_67, %c0_68] : memref<3x16xf32, #tpu.memory_space<vmem>>, vector<1x16xf32>
    %94 = vector.broadcast %93 : vector<1x16xf32> to vector<8x16xf32>
    %95 = arith.addf %92, %94 : vector<8x16xf32>
    %cst_69 = arith.constant 2.000000e-01 : f32
    %96 = vector.broadcast %cst_69 : f32 to vector<8x16xf32>
    %97 = arith.mulf %96, %95 : vector<8x16xf32>
    %98 = arith.maximumf %95, %97 : vector<8x16xf32>
    %c1_70 = arith.constant 1 : index
    %c0_71 = arith.constant 0 : index
    %99 = vector.load %arg17[%c1_70, %c0_71] : memref<3x16xf32, #tpu.memory_space<vmem>>, vector<1x16xf32>
    %100 = vector.broadcast %99 : vector<1x16xf32> to vector<8x16xf32>
    %101 = arith.mulf %98, %100 : vector<8x16xf32>
    %c2_72 = arith.constant 2 : index
    %c0_73 = arith.constant 0 : index
    %102 = vector.load %arg17[%c2_72, %c0_73] : memref<3x16xf32, #tpu.memory_space<vmem>>, vector<1x16xf32>
    %103 = vector.broadcast %102 : vector<1x16xf32> to vector<8x16xf32>
    %104 = arith.addf %101, %103 : vector<8x16xf32>
    %c0_74 = arith.constant 0 : index
    %c0_75 = arith.constant 0 : index
    %105 = vector.load %arg18[%c0_74, %c0_75] : memref<16x4xf32, #tpu.memory_space<vmem>>, vector<16x4xf32>
    %cst_76 = arith.constant dense<0.000000e+00> : vector<8x4xf32>
    %106 = tpu.matmul %104, %105, %cst_76 {dimension_numbers = #tpu.dot_dimension_numbers<[1], [0], [0], [1], [0, 0, 1, 1], [], []>} : vector<8x16xf32>, vector<16x4xf32>, vector<8x4xf32> -> vector<8x4xf32>
    %c0_77 = arith.constant 0 : index
    %c0_78 = arith.constant 0 : index
    %107 = vector.load %arg19[%c0_77, %c0_78] : memref<3x4xf32, #tpu.memory_space<vmem>>, vector<1x4xf32>
    %108 = vector.broadcast %107 : vector<1x4xf32> to vector<8x4xf32>
    %109 = arith.addf %106, %108 : vector<8x4xf32>
    %cst_79 = arith.constant 2.000000e-01 : f32
    %110 = vector.broadcast %cst_79 : f32 to vector<8x4xf32>
    %111 = arith.mulf %110, %109 : vector<8x4xf32>
    %112 = arith.maximumf %109, %111 : vector<8x4xf32>
    %c1_80 = arith.constant 1 : index
    %c0_81 = arith.constant 0 : index
    %113 = vector.load %arg19[%c1_80, %c0_81] : memref<3x4xf32, #tpu.memory_space<vmem>>, vector<1x4xf32>
    %114 = vector.broadcast %113 : vector<1x4xf32> to vector<8x4xf32>
    %115 = arith.mulf %112, %114 : vector<8x4xf32>
    %c2_82 = arith.constant 2 : index
    %c0_83 = arith.constant 0 : index
    %116 = vector.load %arg19[%c2_82, %c0_83] : memref<3x4xf32, #tpu.memory_space<vmem>>, vector<1x4xf32>
    %117 = vector.broadcast %116 : vector<1x4xf32> to vector<8x4xf32>
    %118 = arith.addf %115, %117 : vector<8x4xf32>
    %c0_84 = arith.constant 0 : index
    %c0_85 = arith.constant 0 : index
    %119 = vector.load %arg20[%c0_84, %c0_85] : memref<4x16xf32, #tpu.memory_space<vmem>>, vector<4x16xf32>
    %cst_86 = arith.constant dense<0.000000e+00> : vector<8x16xf32>
    %120 = tpu.matmul %118, %119, %cst_86 {dimension_numbers = #tpu.dot_dimension_numbers<[1], [0], [0], [1], [0, 0, 1, 1], [], []>} : vector<8x4xf32>, vector<4x16xf32>, vector<8x16xf32> -> vector<8x16xf32>
    %c0_87 = arith.constant 0 : index
    %c0_88 = arith.constant 0 : index
    %121 = vector.load %arg21[%c0_87, %c0_88] : memref<64x16xf32, #tpu.memory_space<vmem>>, vector<64x16xf32>
    %cst_89 = arith.constant dense<0.000000e+00> : vector<8x16xf32>
    %122 = tpu.matmul %28, %121, %cst_89 {dimension_numbers = #tpu.dot_dimension_numbers<[1], [0], [0], [1], [0, 0, 1, 1], [], []>} : vector<8x64xf32>, vector<64x16xf32>, vector<8x16xf32> -> vector<8x16xf32>
    %123 = arith.addf %120, %122 : vector<8x16xf32>
    %c0_90 = arith.constant 0 : index
    %c0_91 = arith.constant 0 : index
    %124 = vector.load %arg22[%c0_90, %c0_91] : memref<3x16xf32, #tpu.memory_space<vmem>>, vector<1x16xf32>
    %125 = vector.broadcast %124 : vector<1x16xf32> to vector<8x16xf32>
    %126 = arith.addf %123, %125 : vector<8x16xf32>
    %cst_92 = arith.constant 2.000000e-01 : f32
    %127 = vector.broadcast %cst_92 : f32 to vector<8x16xf32>
    %128 = arith.mulf %127, %126 : vector<8x16xf32>
    %129 = arith.maximumf %126, %128 : vector<8x16xf32>
    %c1_93 = arith.constant 1 : index
    %c0_94 = arith.constant 0 : index
    %130 = vector.load %arg22[%c1_93, %c0_94] : memref<3x16xf32, #tpu.memory_space<vmem>>, vector<1x16xf32>
    %131 = vector.broadcast %130 : vector<1x16xf32> to vector<8x16xf32>
    %132 = arith.mulf %129, %131 : vector<8x16xf32>
    %c2_95 = arith.constant 2 : index
    %c0_96 = arith.constant 0 : index
    %133 = vector.load %arg22[%c2_95, %c0_96] : memref<3x16xf32, #tpu.memory_space<vmem>>, vector<1x16xf32>
    %134 = vector.broadcast %133 : vector<1x16xf32> to vector<8x16xf32>
    %135 = arith.addf %132, %134 : vector<8x16xf32>
    %c0_97 = arith.constant 0 : index
    %c0_98 = arith.constant 0 : index
    %136 = vector.load %arg23[%c0_97, %c0_98] : memref<16x8xf32, #tpu.memory_space<vmem>>, vector<16x8xf32>
    %cst_99 = arith.constant dense<0.000000e+00> : vector<8x8xf32>
    %137 = tpu.matmul %135, %136, %cst_99 {dimension_numbers = #tpu.dot_dimension_numbers<[1], [0], [0], [1], [0, 0, 1, 1], [], []>} : vector<8x16xf32>, vector<16x8xf32>, vector<8x8xf32> -> vector<8x8xf32>
    %c0_100 = arith.constant 0 : index
    %c0_101 = arith.constant 0 : index
    %138 = vector.load %arg24[%c0_100, %c0_101] : memref<3x8xf32, #tpu.memory_space<vmem>>, vector<1x8xf32>
    %139 = vector.broadcast %138 : vector<1x8xf32> to vector<8x8xf32>
    %140 = arith.addf %137, %139 : vector<8x8xf32>
    %cst_102 = arith.constant 2.000000e-01 : f32
    %141 = vector.broadcast %cst_102 : f32 to vector<8x8xf32>
    %142 = arith.mulf %141, %140 : vector<8x8xf32>
    %143 = arith.maximumf %140, %142 : vector<8x8xf32>
    %c1_103 = arith.constant 1 : index
    %c0_104 = arith.constant 0 : index
    %144 = vector.load %arg24[%c1_103, %c0_104] : memref<3x8xf32, #tpu.memory_space<vmem>>, vector<1x8xf32>
    %145 = vector.broadcast %144 : vector<1x8xf32> to vector<8x8xf32>
    %146 = arith.mulf %143, %145 : vector<8x8xf32>
    %c2_105 = arith.constant 2 : index
    %c0_106 = arith.constant 0 : index
    %147 = vector.load %arg24[%c2_105, %c0_106] : memref<3x8xf32, #tpu.memory_space<vmem>>, vector<1x8xf32>
    %148 = vector.broadcast %147 : vector<1x8xf32> to vector<8x8xf32>
    %149 = arith.addf %146, %148 : vector<8x8xf32>
    %c0_107 = arith.constant 0 : index
    %c0_108 = arith.constant 0 : index
    %150 = vector.load %arg25[%c0_107, %c0_108] : memref<8x2xf32, #tpu.memory_space<vmem>>, vector<8x2xf32>
    %cst_109 = arith.constant dense<0.000000e+00> : vector<8x2xf32>
    %151 = tpu.matmul %149, %150, %cst_109 {dimension_numbers = #tpu.dot_dimension_numbers<[1], [0], [0], [1], [0, 0, 1, 1], [], []>} : vector<8x8xf32>, vector<8x2xf32>, vector<8x2xf32> -> vector<8x2xf32>
    %c0_110 = arith.constant 0 : index
    %c0_111 = arith.constant 0 : index
    %152 = vector.load %arg26[%c0_110, %c0_111] : memref<3x2xf32, #tpu.memory_space<vmem>>, vector<1x2xf32>
    %153 = vector.broadcast %152 : vector<1x2xf32> to vector<8x2xf32>
    %154 = arith.addf %151, %153 : vector<8x2xf32>
    %cst_112 = arith.constant 2.000000e-01 : f32
    %155 = vector.broadcast %cst_112 : f32 to vector<8x2xf32>
    %156 = arith.mulf %155, %154 : vector<8x2xf32>
    %157 = arith.maximumf %154, %156 : vector<8x2xf32>
    %c1_113 = arith.constant 1 : index
    %c0_114 = arith.constant 0 : index
    %158 = vector.load %arg26[%c1_113, %c0_114] : memref<3x2xf32, #tpu.memory_space<vmem>>, vector<1x2xf32>
    %159 = vector.broadcast %158 : vector<1x2xf32> to vector<8x2xf32>
    %160 = arith.mulf %157, %159 : vector<8x2xf32>
    %c2_115 = arith.constant 2 : index
    %c0_116 = arith.constant 0 : index
    %161 = vector.load %arg26[%c2_115, %c0_116] : memref<3x2xf32, #tpu.memory_space<vmem>>, vector<1x2xf32>
    %162 = vector.broadcast %161 : vector<1x2xf32> to vector<8x2xf32>
    %163 = arith.addf %160, %162 : vector<8x2xf32>
    %c0_117 = arith.constant 0 : index
    %c0_118 = arith.constant 0 : index
    %164 = vector.load %arg27[%c0_117, %c0_118] : memref<8x128xf32, #tpu.memory_space<vmem>>, vector<8x128xf32>
    %cst_119 = arith.constant dense<0.000000e+00> : vector<8x128xf32>
    %165 = tpu.matmul %73, %164, %cst_119 {dimension_numbers = #tpu.dot_dimension_numbers<[1], [0], [0], [1], [0, 0, 1, 1], [], []>} : vector<8x8xf32>, vector<8x128xf32>, vector<8x128xf32> -> vector<8x128xf32>
    %c0_120 = arith.constant 0 : index
    %c0_121 = arith.constant 0 : index
    %166 = vector.load %arg28[%c0_120, %c0_121] : memref<4x128xf32, #tpu.memory_space<vmem>>, vector<4x128xf32>
    %cst_122 = arith.constant dense<0.000000e+00> : vector<8x128xf32>
    %167 = tpu.matmul %118, %166, %cst_122 {dimension_numbers = #tpu.dot_dimension_numbers<[1], [0], [0], [1], [0, 0, 1, 1], [], []>} : vector<8x4xf32>, vector<4x128xf32>, vector<8x128xf32> -> vector<8x128xf32>
    %168 = arith.addf %165, %167 : vector<8x128xf32>
    %c0_123 = arith.constant 0 : index
    %c0_124 = arith.constant 0 : index
    %169 = vector.load %arg29[%c0_123, %c0_124] : memref<2x128xf32, #tpu.memory_space<vmem>>, vector<2x128xf32>
    %cst_125 = arith.constant dense<0.000000e+00> : vector<8x128xf32>
    %170 = tpu.matmul %163, %169, %cst_125 {dimension_numbers = #tpu.dot_dimension_numbers<[1], [0], [0], [1], [0, 0, 1, 1], [], []>} : vector<8x2xf32>, vector<2x128xf32>, vector<8x128xf32> -> vector<8x128xf32>
    %171 = arith.addf %168, %170 : vector<8x128xf32>
    %c0_126 = arith.constant 0 : index
    %c0_127 = arith.constant 0 : index
    %172 = vector.load %arg30[%c0_126, %c0_127] : memref<1x128xf32, #tpu.memory_space<vmem>>, vector<1x128xf32>
    %173 = vector.broadcast %172 : vector<1x128xf32> to vector<8x128xf32>
    %174 = arith.addf %171, %173 : vector<8x128xf32>
    %c0_128 = arith.constant 0 : index
    %c0_129 = arith.constant 0 : index
    %175 = vector.load %arg31[%c0_128, %c0_129] : memref<8x128xf32, #tpu.memory_space<vmem>>, vector<8x128xf32>
    tpu.vector_store %arg31[%c0_128, %c0_129], %174 {strides = array<i32>} : memref<8x128xf32, #tpu.memory_space<vmem>>, vector<8x128xf32>,
    return
  }
  func.func @transform_0(%arg0: i32) -> (i32, i32) {
    %c0_i32 = arith.constant 0 : i32
    %c0_i32_0 = arith.constant 0 : i32
    return %arg0, %c0_i32 : i32, i32
  }
  func.func @transform_1(%arg0: i32) -> (i32, i32) {
    %c0_i32 = arith.constant 0 : i32
    %c0_i32_0 = arith.constant 0 : i32
    %c0_i32_1 = arith.constant 0 : i32
    return %c0_i32, %c0_i32_0 : i32, i32
  }
  func.func @transform_2(%arg0: i32) -> (i32, i32) {
    %c0_i32 = arith.constant 0 : i32
    %c0_i32_0 = arith.constant 0 : i32
    %c0_i32_1 = arith.constant 0 : i32
    return %c0_i32, %c0_i32_0 : i32, i32
  }
  func.func @transform_3(%arg0: i32) -> (i32, i32) {
    %c0_i32 = arith.constant 0 : i32
    %c0_i32_0 = arith.constant 0 : i32
    %c0_i32_1 = arith.constant 0 : i32
    return %c0_i32, %c0_i32_0 : i32, i32
  }
  func.func @transform_4(%arg0: i32) -> (i32, i32) {
    %c0_i32 = arith.constant 0 : i32
    %c0_i32_0 = arith.constant 0 : i32
    %c0_i32_1 = arith.constant 0 : i32
    return %c0_i32, %c0_i32_0 : i32, i32
  }
  func.func @transform_5(%arg0: i32) -> (i32, i32) {
    %c0_i32 = arith.constant 0 : i32
    %c0_i32_0 = arith.constant 0 : i32
    %c0_i32_1 = arith.constant 0 : i32
    return %c0_i32, %c0_i32_0 : i32, i32
  }
  func.func @transform_6(%arg0: i32) -> (i32, i32) {
    %c0_i32 = arith.constant 0 : i32
    %c0_i32_0 = arith.constant 0 : i32
    %c0_i32_1 = arith.constant 0 : i32
    return %c0_i32, %c0_i32_0 : i32, i32
  }
  func.func @transform_7(%arg0: i32) -> (i32, i32) {
    %c0_i32 = arith.constant 0 : i32
    %c0_i32_0 = arith.constant 0 : i32
    %c0_i32_1 = arith.constant 0 : i32
    return %c0_i32, %c0_i32_0 : i32, i32
  }
  func.func @transform_8(%arg0: i32) -> (i32, i32) {
    %c0_i32 = arith.constant 0 : i32
    %c0_i32_0 = arith.constant 0 : i32
    %c0_i32_1 = arith.constant 0 : i32
    return %c0_i32, %c0_i32_0 : i32, i32
  }
  func.func @transform_9(%arg0: i32) -> (i32, i32) {
    %c0_i32 = arith.constant 0 : i32
    %c0_i32_0 = arith.constant 0 : i32
    %c0_i32_1 = arith.constant 0 : i32
    return %c0_i32, %c0_i32_0 : i32, i32
  }
  func.func @transform_10(%arg0: i32) -> (i32, i32) {
    %c0_i32 = arith.constant 0 : i32
    %c0_i32_0 = arith.constant 0 : i32
    %c0_i32_1 = arith.constant 0 : i32
    return %c0_i32, %c0_i32_0 : i32, i32
  }
  func.func @transform_11(%arg0: i32) -> (i32, i32) {
    %c0_i32 = arith.constant 0 : i32
    %c0_i32_0 = arith.constant 0 : i32
    %c0_i32_1 = arith.constant 0 : i32
    return %c0_i32, %c0_i32_0 : i32, i32
  }
  func.func @transform_12(%arg0: i32) -> (i32, i32) {
    %c0_i32 = arith.constant 0 : i32
    %c0_i32_0 = arith.constant 0 : i32
    %c0_i32_1 = arith.constant 0 : i32
    return %c0_i32, %c0_i32_0 : i32, i32
  }
  func.func @transform_13(%arg0: i32) -> (i32, i32) {
    %c0_i32 = arith.constant 0 : i32
    %c0_i32_0 = arith.constant 0 : i32
    %c0_i32_1 = arith.constant 0 : i32
    return %c0_i32, %c0_i32_0 : i32, i32
  }
  func.func @transform_14(%arg0: i32) -> (i32, i32) {
    %c0_i32 = arith.constant 0 : i32
    %c0_i32_0 = arith.constant 0 : i32
    %c0_i32_1 = arith.constant 0 : i32
    return %c0_i32, %c0_i32_0 : i32, i32
  }
  func.func @transform_15(%arg0: i32) -> (i32, i32) {
    %c0_i32 = arith.constant 0 : i32
    %c0_i32_0 = arith.constant 0 : i32
    %c0_i32_1 = arith.constant 0 : i32
    return %c0_i32, %c0_i32_0 : i32, i32
  }
  func.func @transform_16(%arg0: i32) -> (i32, i32) {
    %c0_i32 = arith.constant 0 : i32
    %c0_i32_0 = arith.constant 0 : i32
    %c0_i32_1 = arith.constant 0 : i32
    return %c0_i32, %c0_i32_0 : i32, i32
  }
  func.func @transform_17(%arg0: i32) -> (i32, i32) {
    %c0_i32 = arith.constant 0 : i32
    %c0_i32_0 = arith.constant 0 : i32
    %c0_i32_1 = arith.constant 0 : i32
    return %c0_i32, %c0_i32_0 : i32, i32
  }
  func.func @transform_18(%arg0: i32) -> (i32, i32) {
    %c0_i32 = arith.constant 0 : i32
    %c0_i32_0 = arith.constant 0 : i32
    %c0_i32_1 = arith.constant 0 : i32
    return %c0_i32, %c0_i32_0 : i32, i32
  }
  func.func @transform_19(%arg0: i32) -> (i32, i32) {
    %c0_i32 = arith.constant 0 : i32
    %c0_i32_0 = arith.constant 0 : i32
    %c0_i32_1 = arith.constant 0 : i32
    return %c0_i32, %c0_i32_0 : i32, i32
  }
  func.func @transform_20(%arg0: i32) -> (i32, i32) {
    %c0_i32 = arith.constant 0 : i32
    %c0_i32_0 = arith.constant 0 : i32
    %c0_i32_1 = arith.constant 0 : i32
    return %c0_i32, %c0_i32_0 : i32, i32
  }
  func.func @transform_21(%arg0: i32) -> (i32, i32) {
    %c0_i32 = arith.constant 0 : i32
    %c0_i32_0 = arith.constant 0 : i32
    %c0_i32_1 = arith.constant 0 : i32
    return %c0_i32, %c0_i32_0 : i32, i32
  }
  func.func @transform_22(%arg0: i32) -> (i32, i32) {
    %c0_i32 = arith.constant 0 : i32
    %c0_i32_0 = arith.constant 0 : i32
    %c0_i32_1 = arith.constant 0 : i32
    return %c0_i32, %c0_i32_0 : i32, i32
  }
  func.func @transform_23(%arg0: i32) -> (i32, i32) {
    %c0_i32 = arith.constant 0 : i32
    %c0_i32_0 = arith.constant 0 : i32
    %c0_i32_1 = arith.constant 0 : i32
    return %c0_i32, %c0_i32_0 : i32, i32
  }
  func.func @transform_24(%arg0: i32) -> (i32, i32) {
    %c0_i32 = arith.constant 0 : i32
    %c0_i32_0 = arith.constant 0 : i32
    %c0_i32_1 = arith.constant 0 : i32
    return %c0_i32, %c0_i32_0 : i32, i32
  }
  func.func @transform_25(%arg0: i32) -> (i32, i32) {
    %c0_i32 = arith.constant 0 : i32
    %c0_i32_0 = arith.constant 0 : i32
    %c0_i32_1 = arith.constant 0 : i32
    return %c0_i32, %c0_i32_0 : i32, i32
  }
  func.func @transform_26(%arg0: i32) -> (i32, i32) {
    %c0_i32 = arith.constant 0 : i32
    %c0_i32_0 = arith.constant 0 : i32
    %c0_i32_1 = arith.constant 0 : i32
    return %c0_i32, %c0_i32_0 : i32, i32
  }
  func.func @transform_27(%arg0: i32) -> (i32, i32) {
    %c0_i32 = arith.constant 0 : i32
    %c0_i32_0 = arith.constant 0 : i32
    %c0_i32_1 = arith.constant 0 : i32
    return %c0_i32, %c0_i32_0 : i32, i32
  }
  func.func @transform_28(%arg0: i32) -> (i32, i32) {
    %c0_i32 = arith.constant 0 : i32
    %c0_i32_0 = arith.constant 0 : i32
    %c0_i32_1 = arith.constant 0 : i32
    return %c0_i32, %c0_i32_0 : i32, i32
  }
  func.func @transform_29(%arg0: i32) -> (i32, i32) {
    %c0_i32 = arith.constant 0 : i32
    %c0_i32_0 = arith.constant 0 : i32
    %c0_i32_1 = arith.constant 0 : i32
    return %c0_i32, %c0_i32_0 : i32, i32
  }
  func.func @transform_30(%arg0: i32) -> (i32, i32) {
    %c0_i32 = arith.constant 0 : i32
    %c0_i32_0 = arith.constant 0 : i32
    return %arg0, %c0_i32 : i32, i32
  }
}

</mosaic_0001>

<llo_original>
// kernel: tpu_custom_call.1
$region0: #{tpu_custom_call.1}
  #allocation0 [shape = 'u32[]', space=smem, size = 0x4, offset = 0x4, fixed_abs, tag = 'smem constant byte address 0x4 - core index']
  #allocation1 [shape = 'u32[72,128]{1,0:T(1,128)}', space=vmem, size = 0x9000, scoped, tag = 'internal scratch']
  %s0 = inlined_call_operand.smem [shape: u32[31], index: -1, kind: input, shape index: {}]
  %s1 = sld [smem:[%s0]]
  %s2 = scalar_lea.smem %s0, 1
  %s3 = sld [smem:[%s2]]
  %s4 = scalar_lea.smem %s0, 2
  %s5 = sld [smem:[%s4]]
  %s6 = scalar_lea.smem %s0, 3
  %s7 = sld [smem:[%s6]]
  %s8 = scalar_lea.smem %s0, 4
  %s9 = sld [smem:[%s8]]
  %s10 = scalar_lea.smem %s0, 5
  %s11 = sld [smem:[%s10]]
  %s12 = scalar_lea.smem %s0, 6
  %s13 = sld [smem:[%s12]]
  %s14 = scalar_lea.smem %s0, 7
  %s15 = sld [smem:[%s14]]
  %s16 = scalar_lea.smem %s0, 8
  %s17 = sld [smem:[%s16]]
  %s18 = scalar_lea.smem %s0, 9
  %s19 = sld [smem:[%s18]]
  %s20 = scalar_lea.smem %s0, 10
  %s21 = sld [smem:[%s20]]
  %s22 = scalar_lea.smem %s0, 11
  %s23 = sld [smem:[%s22]]
  %s24 = scalar_lea.smem %s0, 12
  %s25 = sld [smem:[%s24]]
  %s26 = scalar_lea.smem %s0, 13
  %s27 = sld [smem:[%s26]]
  %s28 = scalar_lea.smem %s0, 14
  %s29 = sld [smem:[%s28]]
  %s30 = scalar_lea.smem %s0, 15
  %s31 = sld [smem:[%s30]]
  %s32 = scalar_lea.smem %s0, 16
  %s33 = sld [smem:[%s32]]
  %s34 = scalar_lea.smem %s0, 17
  %s35 = sld [smem:[%s34]]
  %s36 = scalar_lea.smem %s0, 18
  %s37 = sld [smem:[%s36]]
  %s38 = scalar_lea.smem %s0, 19
  %s39 = sld [smem:[%s38]]
  %s40 = scalar_lea.smem %s0, 20
  %s41 = sld [smem:[%s40]]
  %s42 = scalar_lea.smem %s0, 21
  %s43 = sld [smem:[%s42]]
  %s44 = scalar_lea.smem %s0, 22
  %s45 = sld [smem:[%s44]]
  %s46 = scalar_lea.smem %s0, 23
  %s47 = sld [smem:[%s46]]
  %s48 = scalar_lea.smem %s0, 24
  %s49 = sld [smem:[%s48]]
  %s50 = scalar_lea.smem %s0, 25
  %s51 = sld [smem:[%s50]]
  %s52 = scalar_lea.smem %s0, 26
  %s53 = sld [smem:[%s52]]
  %s54 = scalar_lea.smem %s0, 27
  %s55 = sld [smem:[%s54]]
  %s56 = scalar_lea.smem %s0, 28
  %s57 = sld [smem:[%s56]]
  %s58 = scalar_lea.smem %s0, 29
  %s59 = sld [smem:[%s58]]
  %s60 = scalar_lea.smem %s0, 30
  %s61 = sld [smem:[%s60]]
  %s62 = sld [smem:[#allocation0]]
  $region130: #{tpu_custom_call.1} parent=0
    _
  %s64 = ssub.s32 1, %s62
  %s65 = scalar_select 0, %s64, %s62
  $region1: #{tpu_custom_call.1} parent=0
    #allocation2 [shape = 'u8[4096]{0}', space=vmem, size = 0x1000, scoped, tag = 'output window, operand 0, single buffered']
    #allocation3 [shape = 's32[1]{0}', space=sflag, size = 0x4, scoped, tag = 'scoped memory for tpu_custom_call.1']
    %66 = vsyncpa [#allocation3], 0
    // Predicated region
    $region2: #{tpu_custom_call.1} parent=1 // pred_check
      _
    $region3: #{tpu_custom_call.1} parent=1 // pred_check_branch
      %68 = sbr.rel (0) target = $region5
    $region4: #{tpu_custom_call.1} parent=1 // pred_region
      _
    $region5: #{tpu_custom_call.1} parent=1 // pred_fallthru
      _
    // Predicated region
    $region6: #{tpu_custom_call.1} parent=1 // pred_check
      _
    $region7: #{tpu_custom_call.1} parent=1 // pred_check_branch
      %70 = sbr.rel (0) target = $region9
    $region8: #{tpu_custom_call.1} parent=1 // pred_region
      _
    $region9: #{tpu_custom_call.1} parent=1 // pred_fallthru
      _
    // Predicated region
    $region10: #{tpu_custom_call.1} parent=1 // pred_check
      _
    $region11: #{tpu_custom_call.1} parent=1 // pred_check_branch
      %72 = sbr.rel (0) target = $region13
    $region12: #{tpu_custom_call.1} parent=1 // pred_region
      _
    $region13: #{tpu_custom_call.1} parent=1 // pred_fallthru
      _
    // Predicated region
    $region14: #{tpu_custom_call.1} parent=1 // pred_check
      _
    $region15: #{tpu_custom_call.1} parent=1 // pred_check_branch
      %74 = sbr.rel (0) target = $region17
    $region16: #{tpu_custom_call.1} parent=1 // pred_region
      _
    $region17: #{tpu_custom_call.1} parent=1 // pred_fallthru
      _
    // Predicated region
    $region18: #{tpu_custom_call.1} parent=1 // pred_check
      _
    $region19: #{tpu_custom_call.1} parent=1 // pred_check_branch
      %76 = sbr.rel (0) target = $region21
    $region20: #{tpu_custom_call.1} parent=1 // pred_region
      _
    $region21: #{tpu_custom_call.1} parent=1 // pred_fallthru
      _
    // Predicated region
    $region22: #{tpu_custom_call.1} parent=1 // pred_check
      _
    $region23: #{tpu_custom_call.1} parent=1 // pred_check_branch
      %78 = sbr.rel (0) target = $region25
    $region24: #{tpu_custom_call.1} parent=1 // pred_region
      _
    $region25: #{tpu_custom_call.1} parent=1 // pred_fallthru
      _
    // Predicated region
    $region26: #{tpu_custom_call.1} parent=1 // pred_check
      _
    $region27: #{tpu_custom_call.1} parent=1 // pred_check_branch
      %80 = sbr.rel (0) target = $region29
    $region28: #{tpu_custom_call.1} parent=1 // pred_region
      _
    $region29: #{tpu_custom_call.1} parent=1 // pred_fallthru
      _
    // Predicated region
    $region30: #{tpu_custom_call.1} parent=1 // pred_check
      _
    $region31: #{tpu_custom_call.1} parent=1 // pred_check_branch
      %82 = sbr.rel (0) target = $region33
    $region32: #{tpu_custom_call.1} parent=1 // pred_region
      _
    $region33: #{tpu_custom_call.1} parent=1 // pred_fallthru
      _
    // Predicated region
    $region34: #{tpu_custom_call.1} parent=1 // pred_check
      _
    $region35: #{tpu_custom_call.1} parent=1 // pred_check_branch
      %84 = sbr.rel (0) target = $region37
    $region36: #{tpu_custom_call.1} parent=1 // pred_region
      _
    $region37: #{tpu_custom_call.1} parent=1 // pred_fallthru
      _
    // Predicated region
    $region38: #{tpu_custom_call.1} parent=1 // pred_check
      _
    $region39: #{tpu_custom_call.1} parent=1 // pred_check_branch
      %86 = sbr.rel (0) target = $region41
    $region40: #{tpu_custom_call.1} parent=1 // pred_region
      _
    $region41: #{tpu_custom_call.1} parent=1 // pred_fallthru
      _
    // Predicated region
    $region42: #{tpu_custom_call.1} parent=1 // pred_check
      _
    $region43: #{tpu_custom_call.1} parent=1 // pred_check_branch
      %88 = sbr.rel (0) target = $region45
    $region44: #{tpu_custom_call.1} parent=1 // pred_region
      _
    $region45: #{tpu_custom_call.1} parent=1 // pred_fallthru
      _
    // Predicated region
    $region46: #{tpu_custom_call.1} parent=1 // pred_check
      _
    $region47: #{tpu_custom_call.1} parent=1 // pred_check_branch
      %90 = sbr.rel (0) target = $region49
    $region48: #{tpu_custom_call.1} parent=1 // pred_region
      _
    $region49: #{tpu_custom_call.1} parent=1 // pred_fallthru
      _
    // Predicated region
    $region50: #{tpu_custom_call.1} parent=1 // pred_check
      _
    $region51: #{tpu_custom_call.1} parent=1 // pred_check_branch
      %92 = sbr.rel (0) target = $region53
    $region52: #{tpu_custom_call.1} parent=1 // pred_region
      _
    $region53: #{tpu_custom_call.1} parent=1 // pred_fallthru
      _
    // Predicated region
    $region54: #{tpu_custom_call.1} parent=1 // pred_check
      _
    $region55: #{tpu_custom_call.1} parent=1 // pred_check_branch
      %94 = sbr.rel (0) target = $region57
    $region56: #{tpu_custom_call.1} parent=1 // pred_region
      _
    $region57: #{tpu_custom_call.1} parent=1 // pred_fallthru
      _
    // Predicated region
    $region58: #{tpu_custom_call.1} parent=1 // pred_check
      _
    $region59: #{tpu_custom_call.1} parent=1 // pred_check_branch
      %96 = sbr.rel (0) target = $region61
    $region60: #{tpu_custom_call.1} parent=1 // pred_region
      _
    $region61: #{tpu_custom_call.1} parent=1 // pred_fallthru
      _
    // Predicated region
    $region62: #{tpu_custom_call.1} parent=1 // pred_check
      _
    $region63: #{tpu_custom_call.1} parent=1 // pred_check_branch
      %98 = sbr.rel (0) target = $region65
    $region64: #{tpu_custom_call.1} parent=1 // pred_region
      _
    $region65: #{tpu_custom_call.1} parent=1 // pred_fallthru
      _
    // Predicated region
    $region66: #{tpu_custom_call.1} parent=1 // pred_check
      _
    $region67: #{tpu_custom_call.1} parent=1 // pred_check_branch
      %100 = sbr.rel (0) target = $region69
    $region68: #{tpu_custom_call.1} parent=1 // pred_region
      _
    $region69: #{tpu_custom_call.1} parent=1 // pred_fallthru
      _
    // Predicated region
    $region70: #{tpu_custom_call.1} parent=1 // pred_check
      _
    $region71: #{tpu_custom_call.1} parent=1 // pred_check_branch
      %102 = sbr.rel (0) target = $region73
    $region72: #{tpu_custom_call.1} parent=1 // pred_region
      _
    $region73: #{tpu_custom_call.1} parent=1 // pred_fallthru
      _
    // Predicated region
    $region74: #{tpu_custom_call.1} parent=1 // pred_check
      _
    $region75: #{tpu_custom_call.1} parent=1 // pred_check_branch
      %104 = sbr.rel (0) target = $region77
    $region76: #{tpu_custom_call.1} parent=1 // pred_region
      _
    $region77: #{tpu_custom_call.1} parent=1 // pred_fallthru
      _
    // Predicated region
    $region78: #{tpu_custom_call.1} parent=1 // pred_check
      _
    $region79: #{tpu_custom_call.1} parent=1 // pred_check_branch
      %106 = sbr.rel (0) target = $region81
    $region80: #{tpu_custom_call.1} parent=1 // pred_region
      _
    $region81: #{tpu_custom_call.1} parent=1 // pred_fallthru
      _
    // Predicated region
    $region82: #{tpu_custom_call.1} parent=1 // pred_check
      _
    $region83: #{tpu_custom_call.1} parent=1 // pred_check_branch
      %108 = sbr.rel (0) target = $region85
    $region84: #{tpu_custom_call.1} parent=1 // pred_region
      _
    $region85: #{tpu_custom_call.1} parent=1 // pred_fallthru
      _
    // Predicated region
    $region86: #{tpu_custom_call.1} parent=1 // pred_check
      _
    $region87: #{tpu_custom_call.1} parent=1 // pred_check_branch
      %110 = sbr.rel (0) target = $region89
    $region88: #{tpu_custom_call.1} parent=1 // pred_region
      _
    $region89: #{tpu_custom_call.1} parent=1 // pred_fallthru
      _
    // Predicated region
    $region90: #{tpu_custom_call.1} parent=1 // pred_check
      _
    $region91: #{tpu_custom_call.1} parent=1 // pred_check_branch
      %112 = sbr.rel (0) target = $region93
    $region92: #{tpu_custom_call.1} parent=1 // pred_region
      _
    $region93: #{tpu_custom_call.1} parent=1 // pred_fallthru
      _
    // Predicated region
    $region94: #{tpu_custom_call.1} parent=1 // pred_check
      _
    $region95: #{tpu_custom_call.1} parent=1 // pred_check_branch
      %114 = sbr.rel (0) target = $region97
    $region96: #{tpu_custom_call.1} parent=1 // pred_region
      _
    $region97: #{tpu_custom_call.1} parent=1 // pred_fallthru
      _
    // Predicated region
    $region98: #{tpu_custom_call.1} parent=1 // pred_check
      _
    $region99: #{tpu_custom_call.1} parent=1 // pred_check_branch
      %116 = sbr.rel (0) target = $region101
    $region100: #{tpu_custom_call.1} parent=1 // pred_region
      _
    $region101: #{tpu_custom_call.1} parent=1 // pred_fallthru
      _
    // Predicated region
    $region102: #{tpu_custom_call.1} parent=1 // pred_check
      _
    $region103: #{tpu_custom_call.1} parent=1 // pred_check_branch
      %118 = sbr.rel (0) target = $region105
    $region104: #{tpu_custom_call.1} parent=1 // pred_region
      _
    $region105: #{tpu_custom_call.1} parent=1 // pred_fallthru
      _
    // Predicated region
    $region106: #{tpu_custom_call.1} parent=1 // pred_check
      _
    $region107: #{tpu_custom_call.1} parent=1 // pred_check_branch
      %120 = sbr.rel (0) target = $region109
    $region108: #{tpu_custom_call.1} parent=1 // pred_region
      _
    $region109: #{tpu_custom_call.1} parent=1 // pred_fallthru
      _
    // Predicated region
    $region110: #{tpu_custom_call.1} parent=1 // pred_check
      _
    $region111: #{tpu_custom_call.1} parent=1 // pred_check_branch
      %122 = sbr.rel (0) target = $region113
    $region112: #{tpu_custom_call.1} parent=1 // pred_region
      _
    $region113: #{tpu_custom_call.1} parent=1 // pred_fallthru
      _
    // Predicated region
    $region114: #{tpu_custom_call.1} parent=1 // pred_check
      _
    $region115: #{tpu_custom_call.1} parent=1 // pred_check_branch
      %124 = sbr.rel (0) target = $region117
    $region116: #{tpu_custom_call.1} parent=1 // pred_region
      _
    $region117: #{tpu_custom_call.1} parent=1 // pred_fallthru
      _
    // Predicated region
    $region118: #{tpu_custom_call.1} parent=1 // pred_check
      _
    $region119: #{tpu_custom_call.1} parent=1 // pred_check_branch
      %126 = sbr.rel (0) target = $region121
    $region120: #{tpu_custom_call.1} parent=1 // pred_region
      _
    $region121: #{tpu_custom_call.1} parent=1 // pred_fallthru
      _
    %v127 = vld [vmem:[%s1] sm:$0xff]
    %v128 = vld [vmem:[%s1 + $0x8] sm:$0xff]
    %v129 = vld [vmem:[%s3] sm:$0xff]
    %v130 = vld [vmem:[%s3 + $0x8] sm:$0xff]
    %v131 = vld [vmem:[%s3 + $0x10] sm:$0xff]
    %v132 = vld [vmem:[%s3 + $0x18] sm:$0xff]
    %v133 = vld [vmem:[%s3 + $0x20] sm:$0xff]
    %v134 = vld [vmem:[%s3 + $0x28] sm:$0xff]
    %v135 = vld [vmem:[%s3 + $0x30] sm:$0xff]
    %v136 = vld [vmem:[%s3 + $0x38] sm:$0xff]
    %v137 = vld [vmem:[%s3 + $0x40] sm:$0xff]
    %v138 = vld [vmem:[%s3 + $0x48] sm:$0xff]
    %v139 = vld [vmem:[%s3 + $0x50] sm:$0xff]
    %v140 = vld [vmem:[%s3 + $0x58] sm:$0xff]
    %v141 = vld [vmem:[%s3 + $0x60] sm:$0xff]
    %v142 = vld [vmem:[%s3 + $0x68] sm:$0xff]
    %v143 = vld [vmem:[%s3 + $0x70] sm:$0xff]
    %v144 = vld [vmem:[%s3 + $0x78] sm:$0xff]
    %v145 = vld [vmem:[%s3 + $0x80] sm:$0xff]
    %v146 = vld [vmem:[%s3 + $0x88] sm:$0xff]
    %v147 = vld [vmem:[%s3 + $0x90] sm:$0xff]
    %v148 = vld [vmem:[%s3 + $0x98] sm:$0xff]
    %v149 = vld [vmem:[%s3 + $0xa0] sm:$0xff]
    %v150 = vld [vmem:[%s3 + $0xa8] sm:$0xff]
    %v151 = vld [vmem:[%s3 + $0xb0] sm:$0xff]
    %v152 = vld [vmem:[%s3 + $0xb8] sm:$0xff]
    %v153 = vld [vmem:[%s3 + $0xc0] sm:$0xff]
    %v154 = vld [vmem:[%s3 + $0xc8] sm:$0xff]
    %v155 = vld [vmem:[%s3 + $0xd0] sm:$0xff]
    %v156 = vld [vmem:[%s3 + $0xd8] sm:$0xff]
    %v157 = vld [vmem:[%s3 + $0xe0] sm:$0xff]
    %v158 = vld [vmem:[%s3 + $0xe8] sm:$0xff]
    %v159 = vld [vmem:[%s3 + $0xf0] sm:$0xff]
    %v160 = vld [vmem:[%s3 + $0xf8] sm:$0xff]
    %v161 = vld [vmem:[%s7] sm:$0x1]
    %v162 = vperm.slane %v161, 0
    %163 = vmatpush.msra.mxu0 %v144
    %164 = vmatpush.msra.mxu0 %v143
    %165 = vmatpush.msra.mxu0 %v142
    %166 = vmatpush.msra.mxu0 %v141
    %167 = vmatpush.msra.mxu0 %v140
    %168 = vmatpush.msra.mxu0 %v139
    %169 = vmatpush.msra.mxu0 %v138
    %170 = vmatpush.msra.mxu0 %v137
    %171 = vmatpush.msra.mxu0 %v136
    %172 = vmatpush.msra.mxu0 %v135
    %173 = vmatpush.msra.mxu0 %v134
    %174 = vmatpush.msra.mxu0 %v133
    %175 = vmatpush.msra.mxu0 %v132
    %176 = vmatpush.msra.mxu0 %v131
    %177 = vmatpush.msra.mxu0 %v130
    %178 = vmatpush.msra.mxu0 %v129
    %179 = vmatmul.f32.gmra.mxu0 %v127
    %v180 = vpop.f32.mrf.mxu0
    %v181 = vadd.f32 %v162, %v180
    %182 = vdwg.mxu0
    %183 = vmatpush.msra.mxu0 %v160
    %184 = vmatpush.msra.mxu0 %v159
    %185 = vmatpush.msra.mxu0 %v158
    %186 = vmatpush.msra.mxu0 %v157
    %187 = vmatpush.msra.mxu0 %v156
    %188 = vmatpush.msra.mxu0 %v155
    %189 = vmatpush.msra.mxu0 %v154
    %190 = vmatpush.msra.mxu0 %v153
    %191 = vmatpush.msra.mxu0 %v152
    %192 = vmatpush.msra.mxu0 %v151
    %193 = vmatpush.msra.mxu0 %v150
    %194 = vmatpush.msra.mxu0 %v149
    %195 = vmatpush.msra.mxu0 %v148
    %196 = vmatpush.msra.mxu0 %v147
    %197 = vmatpush.msra.mxu0 %v146
    %198 = vmatpush.msra.mxu0 %v145
    %199 = vmatmul.f32.gmra.mxu0 %v128
    %v200 = vpop.f32.mrf.mxu0
    %v201 = vadd.f32 %v181, %v200
    %202 = vdwg.mxu0
    %v203 = vmul.f32 %v201, 0.2
    %v204 = vmax.f32 %v201, %v203
    %v205 = vld [vmem:[%s7 + $0x1] sm:$0x1]
    %v206 = vperm.slane %v205, 0
    %v207 = vmul.f32 %v204, %v206
    %v208 = vld [vmem:[%s7 + $0x2] sm:$0x1]
    %v209 = vperm.slane %v208, 0
    %v210 = vadd.f32 %v207, %v209
    %v211 = vld [vmem:[%s5] sm:$0xff]
    %v212 = vld [vmem:[%s5 + $0x8] sm:$0xff]
    %v213 = vld [vmem:[%s5 + $0x10] sm:$0xff]
    %v214 = vld [vmem:[%s5 + $0x18] sm:$0xff]
    %v215 = vld [vmem:[%s5 + $0x20] sm:$0xff]
    %v216 = vld [vmem:[%s5 + $0x28] sm:$0xff]
    %v217 = vld [vmem:[%s5 + $0x30] sm:$0xff]
    %v218 = vld [vmem:[%s5 + $0x38] sm:$0xff]
    %v219 = vld [vmem:[%s5 + $0x40] sm:$0xff]
    %v220 = vld [vmem:[%s5 + $0x48] sm:$0xff]
    %v221 = vld [vmem:[%s5 + $0x50] sm:$0xff]
    %v222 = vld [vmem:[%s5 + $0x58] sm:$0xff]
    %v223 = vld [vmem:[%s5 + $0x60] sm:$0xff]
    %v224 = vld [vmem:[%s5 + $0x68] sm:$0xff]
    %v225 = vld [vmem:[%s5 + $0x70] sm:$0xff]
    %v226 = vld [vmem:[%s5 + $0x78] sm:$0xff]
    %v227 = vld [vmem:[%s5 + $0x80] sm:$0xff]
    %v228 = vld [vmem:[%s5 + $0x88] sm:$0xff]
    %v229 = vld [vmem:[%s5 + $0x90] sm:$0xff]
    %v230 = vld [vmem:[%s5 + $0x98] sm:$0xff]
    %v231 = vld [vmem:[%s5 + $0xa0] sm:$0xff]
    %v232 = vld [vmem:[%s5 + $0xa8] sm:$0xff]
    %v233 = vld [vmem:[%s5 + $0xb0] sm:$0xff]
    %v234 = vld [vmem:[%s5 + $0xb8] sm:$0xff]
    %v235 = vld [vmem:[%s5 + $0xc0] sm:$0xff]
    %v236 = vld [vmem:[%s5 + $0xc8] sm:$0xff]
    %v237 = vld [vmem:[%s5 + $0xd0] sm:$0xff]
    %v238 = vld [vmem:[%s5 + $0xd8] sm:$0xff]
    %v239 = vld [vmem:[%s5 + $0xe0] sm:$0xff]
    %v240 = vld [vmem:[%s5 + $0xe8] sm:$0xff]
    %v241 = vld [vmem:[%s5 + $0xf0] sm:$0xff]
    %v242 = vld [vmem:[%s5 + $0xf8] sm:$0xff]
    %v243 = vld [vmem:[%s9] sm:$0x1]
    %v244 = vperm.slane %v243, 0
    %245 = vmatpush.msra.mxu0 %v226
    %246 = vmatpush.msra.mxu0 %v225
    %247 = vmatpush.msra.mxu0 %v224
    %248 = vmatpush.msra.mxu0 %v223
    %249 = vmatpush.msra.mxu0 %v222
    %250 = vmatpush.msra.mxu0 %v221
    %251 = vmatpush.msra.mxu0 %v220
    %252 = vmatpush.msra.mxu0 %v219
    %253 = vmatpush.msra.mxu0 %v218
    %254 = vmatpush.msra.mxu0 %v217
    %255 = vmatpush.msra.mxu0 %v216
    %256 = vmatpush.msra.mxu0 %v215
    %257 = vmatpush.msra.mxu0 %v214
    %258 = vmatpush.msra.mxu0 %v213
    %259 = vmatpush.msra.mxu0 %v212
    %260 = vmatpush.msra.mxu0 %v211
    %261 = vmatmul.f32.gmra.mxu0 %v127
    %v262 = vpop.f32.mrf.mxu0
    %v263 = vadd.f32 %v244, %v262
    %264 = vdwg.mxu0
    %265 = vmatpush.msra.mxu0 %v242
    %266 = vmatpush.msra.mxu0 %v241
    %267 = vmatpush.msra.mxu0 %v240
    %268 = vmatpush.msra.mxu0 %v239
    %269 = vmatpush.msra.mxu0 %v238
    %270 = vmatpush.msra.mxu0 %v237
    %271 = vmatpush.msra.mxu0 %v236
    %272 = vmatpush.msra.mxu0 %v235
    %273 = vmatpush.msra.mxu0 %v234
    %274 = vmatpush.msra.mxu0 %v233
    %275 = vmatpush.msra.mxu0 %v232
    %276 = vmatpush.msra.mxu0 %v231
    %277 = vmatpush.msra.mxu0 %v230
    %278 = vmatpush.msra.mxu0 %v229
    %279 = vmatpush.msra.mxu0 %v228
    %280 = vmatpush.msra.mxu0 %v227
    %281 = vmatmul.f32.gmra.mxu0 %v128
    %v282 = vpop.f32.mrf.mxu0
    %v283 = vadd.f32 %v263, %v282
    %284 = vdwg.mxu0
    %v285 = vmul.f32 %v283, 0.2
    %v286 = vmax.f32 %v283, %v285
    %v287 = vld [vmem:[%s9 + $0x1] sm:$0x1]
    %v288 = vperm.slane %v287, 0
    %v289 = vmul.f32 %v286, %v288
    %v290 = vld [vmem:[%s9 + $0x2] sm:$0x1]
    %v291 = vperm.slane %v290, 0
    %v292 = vadd.f32 %v289, %v291
    %v293 = vld [vmem:[%s11] sm:$0xff]
    %v294 = vld [vmem:[%s11 + $0x8] sm:$0xff]
    %v295 = vld [vmem:[%s11 + $0x10] sm:$0xff]
    %v296 = vld [vmem:[%s11 + $0x18] sm:$0xff]
    %v297 = vld [vmem:[%s11 + $0x20] sm:$0xff]
    %v298 = vld [vmem:[%s11 + $0x28] sm:$0xff]
    %v299 = vld [vmem:[%s11 + $0x30] sm:$0xff]
    %v300 = vld [vmem:[%s11 + $0x38] sm:$0xff]
    %v301 = vld [vmem:[%s13] sm:$0xff]
    %v302 = vld [vmem:[%s13 + $0x8] sm:$0xff]
    %v303 = vld [vmem:[%s13 + $0x10] sm:$0xff]
    %v304 = vld [vmem:[%s13 + $0x18] sm:$0xff]
    %v305 = vld [vmem:[%s13 + $0x20] sm:$0xff]
    %v306 = vld [vmem:[%s13 + $0x28] sm:$0xff]
    %v307 = vld [vmem:[%s13 + $0x30] sm:$0xff]
    %v308 = vld [vmem:[%s13 + $0x38] sm:$0xff]
    %vm309 = vcmask 523264
    %v311 = vsel %vm309, %v292, 0
    %313 = vmatpush.msra.mxu0 0.0
    %314 = vmatpush.msra.mxu0 0.0
    %315 = vmatpush.msra.mxu0 0.0
    %316 = vmatpush.msra.mxu0 0.0
    %317 = vmatpush.msra.mxu0 0.0
    %318 = vmatpush.msra.mxu0 0.0
    %319 = vmatpush.msra.mxu0 0.0
    %320 = vmatpush.msra.mxu0 0.0
    %321 = vmatpush.msra.mxu0 %v308
    %322 = vmatpush.msra.mxu0 %v307
    %323 = vmatpush.msra.mxu0 %v306
    %324 = vmatpush.msra.mxu0 %v305
    %325 = vmatpush.msra.mxu0 %v304
    %326 = vmatpush.msra.mxu0 %v303
    %327 = vmatpush.msra.mxu0 %v302
    %328 = vmatpush.msra.mxu0 %v301
    %329 = vmatmul.f32.gmra.mxu0 %v311
    %v330 = vpop.f32.mrf.mxu0
    %v331 = vadd.f32 0.0, %v330
    %332 = vdwg.mxu0
    %v334 = vsel %vm309, %v210, 0
    %336 = vmatpush.msra.mxu0 0.0
    %337 = vmatpush.msra.mxu0 0.0
    %338 = vmatpush.msra.mxu0 0.0
    %339 = vmatpush.msra.mxu0 0.0
    %340 = vmatpush.msra.mxu0 0.0
    %341 = vmatpush.msra.mxu0 0.0
    %342 = vmatpush.msra.mxu0 0.0
    %343 = vmatpush.msra.mxu0 0.0
    %344 = vmatpush.msra.mxu0 %v300
    %345 = vmatpush.msra.mxu0 %v299
    %346 = vmatpush.msra.mxu0 %v298
    %347 = vmatpush.msra.mxu0 %v297
    %348 = vmatpush.msra.mxu0 %v296
    %349 = vmatpush.msra.mxu0 %v295
    %350 = vmatpush.msra.mxu0 %v294
    %351 = vmatpush.msra.mxu0 %v293
    %352 = vmatmul.f32.gmra.mxu0 %v334
    %v353 = vpop.f32.mrf.mxu0
    %v354 = vadd.f32 %v331, %v353
    %355 = vdwg.mxu0
    %v356 = vld [vmem:[%s15] sm:$0x1]
    %v357 = vperm.slane %v356, 0
    %v358 = vadd.f32 %v354, %v357
    %v359 = vmul.f32 %v358, 0.2
    %v360 = vmax.f32 %v358, %v359
    %v361 = vld [vmem:[%s15 + $0x1] sm:$0x1]
    %v362 = vperm.slane %v361, 0
    %v363 = vmul.f32 %v360, %v362
    %v364 = vld [vmem:[%s15 + $0x2] sm:$0x1]
    %v365 = vperm.slane %v364, 0
    %v366 = vadd.f32 %v363, %v365
    %v367 = vld [vmem:[%s17] sm:$0xff]
    %v368 = vld [vmem:[%s17 + $0x8] sm:$0xff]
    %v369 = vld [vmem:[%s17 + $0x10] sm:$0xff]
    %v370 = vld [vmem:[%s17 + $0x18] sm:$0xff]
    %v371 = vld [vmem:[%s17 + $0x20] sm:$0xff]
    %v372 = vld [vmem:[%s17 + $0x28] sm:$0xff]
    %v373 = vld [vmem:[%s17 + $0x30] sm:$0xff]
    %v374 = vld [vmem:[%s17 + $0x38] sm:$0xff]
    %v375 = vld [vmem:[%s19] sm:$0x1]
    %v376 = vperm.slane %v375, 0
    %v378 = vsel %vm309, %v366, 0
    %380 = vmatpush.msra.mxu0 0.0
    %381 = vmatpush.msra.mxu0 0.0
    %382 = vmatpush.msra.mxu0 0.0
    %383 = vmatpush.msra.mxu0 0.0
    %384 = vmatpush.msra.mxu0 0.0
    %385 = vmatpush.msra.mxu0 0.0
    %386 = vmatpush.msra.mxu0 0.0
    %387 = vmatpush.msra.mxu0 0.0
    %388 = vmatpush.msra.mxu0 %v374
    %389 = vmatpush.msra.mxu0 %v373
    %390 = vmatpush.msra.mxu0 %v372
    %391 = vmatpush.msra.mxu0 %v371
    %392 = vmatpush.msra.mxu0 %v370
    %393 = vmatpush.msra.mxu0 %v369
    %394 = vmatpush.msra.mxu0 %v368
    %395 = vmatpush.msra.mxu0 %v367
    %396 = vmatmul.f32.gmra.mxu0 %v378
    %v397 = vpop.f32.mrf.mxu0
    %v398 = vadd.f32 %v376, %v397
    %399 = vdwg.mxu0
    %v400 = vmul.f32 %v398, 0.2
    %v401 = vmax.f32 %v398, %v400
    %v402 = vld [vmem:[%s19 + $0x1] sm:$0x1]
    %v403 = vperm.slane %v402, 0
    %v404 = vmul.f32 %v401, %v403
    %v405 = vld [vmem:[%s19 + $0x2] sm:$0x1]
    %v406 = vperm.slane %v405, 0
    %v407 = vadd.f32 %v404, %v406
    %v408 = vld [vmem:[%s21] sm:$0xff]
    %v409 = vld [vmem:[%s21 + $0x8] sm:$0xff]
    %v410 = vld [vmem:[%s21 + $0x10] sm:$0xff]
    %v411 = vld [vmem:[%s21 + $0x18] sm:$0xff]
    %v412 = vld [vmem:[%s23] sm:$0x1]
    %v413 = vperm.slane %v412, 0
    %vm414 = vcmask 261120
    %v416 = vsel %vm414, %v407, 0
    %418 = vmatpush.msra.mxu0 0.0
    %419 = vmatpush.msra.mxu0 0.0
    %420 = vmatpush.msra.mxu0 0.0
    %421 = vmatpush.msra.mxu0 0.0
    %422 = vmatpush.msra.mxu0 0.0
    %423 = vmatpush.msra.mxu0 0.0
    %424 = vmatpush.msra.mxu0 0.0
    %425 = vmatpush.msra.mxu0 0.0
    %426 = vmatpush.msra.mxu0 0.0
    %427 = vmatpush.msra.mxu0 0.0
    %428 = vmatpush.msra.mxu0 0.0
    %429 = vmatpush.msra.mxu0 0.0
    %430 = vmatpush.msra.mxu0 %v411
    %431 = vmatpush.msra.mxu0 %v410
    %432 = vmatpush.msra.mxu0 %v409
    %433 = vmatpush.msra.mxu0 %v408
    %434 = vmatmul.f32.gmra.mxu0 %v416
    %v435 = vpop.f32.mrf.mxu0
    %v436 = vadd.f32 %v413, %v435
    %437 = vdwg.mxu0
    %v438 = vmul.f32 %v436, 0.2
    %v439 = vmax.f32 %v436, %v438
    %v440 = vld [vmem:[%s23 + $0x1] sm:$0x1]
    %v441 = vperm.slane %v440, 0
    %v442 = vmul.f32 %v439, %v441
    %v443 = vld [vmem:[%s23 + $0x2] sm:$0x1]
    %v444 = vperm.slane %v443, 0
    %v445 = vadd.f32 %v442, %v444
    %v446 = vld [vmem:[%s25] sm:$0xff]
    %v447 = vld [vmem:[%s27] sm:$0xff]
    %v448 = vld [vmem:[%s27 + $0x8] sm:$0xff]
    %v449 = vld [vmem:[%s27 + $0x10] sm:$0xff]
    %v450 = vld [vmem:[%s27 + $0x18] sm:$0xff]
    %v451 = vld [vmem:[%s27 + $0x20] sm:$0xff]
    %v452 = vld [vmem:[%s27 + $0x28] sm:$0xff]
    %v453 = vld [vmem:[%s27 + $0x30] sm:$0xff]
    %v454 = vld [vmem:[%s27 + $0x38] sm:$0xff]
    %455 = vmatpush.msra.mxu0 0.0
    %456 = vmatpush.msra.mxu0 0.0
    %457 = vmatpush.msra.mxu0 0.0
    %458 = vmatpush.msra.mxu0 0.0
    %459 = vmatpush.msra.mxu0 0.0
    %460 = vmatpush.msra.mxu0 0.0
    %461 = vmatpush.msra.mxu0 0.0
    %462 = vmatpush.msra.mxu0 0.0
    %463 = vmatpush.msra.mxu0 %v454
    %464 = vmatpush.msra.mxu0 %v453
    %465 = vmatpush.msra.mxu0 %v452
    %466 = vmatpush.msra.mxu0 %v451
    %467 = vmatpush.msra.mxu0 %v450
    %468 = vmatpush.msra.mxu0 %v449
    %469 = vmatpush.msra.mxu0 %v448
    %470 = vmatpush.msra.mxu0 %v447
    %471 = vmatmul.f32.gmra.mxu0 %v311
    %v472 = vpop.f32.mrf.mxu0
    %v473 = vadd.f32 0.0, %v472
    %474 = vdwg.mxu0
    %vm475 = vcmask 64512
    %v477 = vsel %vm475, %v445, 0
    %479 = vmatpush.msra.mxu0 0.0
    %480 = vmatpush.msra.mxu0 0.0
    %481 = vmatpush.msra.mxu0 0.0
    %482 = vmatpush.msra.mxu0 0.0
    %483 = vmatpush.msra.mxu0 0.0
    %484 = vmatpush.msra.mxu0 0.0
    %485 = vmatpush.msra.mxu0 0.0
    %486 = vmatpush.msra.mxu0 0.0
    %487 = vmatpush.msra.mxu0 0.0
    %488 = vmatpush.msra.mxu0 0.0
    %489 = vmatpush.msra.mxu0 0.0
    %490 = vmatpush.msra.mxu0 0.0
    %491 = vmatpush.msra.mxu0 0.0
    %492 = vmatpush.msra.mxu0 0.0
    %493 = vmatpush.msra.mxu0 0.0
    %494 = vmatpush.msra.mxu0 %v446
    %495 = vmatmul.f32.gmra.mxu0 %v477
    %v496 = vpop.f32.mrf.mxu0
    %v497 = vadd.f32 %v473, %v496
    %498 = vdwg.mxu0
    %v499 = vld [vmem:[%s29] sm:$0x1]
    %v500 = vperm.slane %v499, 0
    %v501 = vadd.f32 %v497, %v500
    %v502 = vmul.f32 %v501, 0.2
    %v503 = vmax.f32 %v501, %v502
    %v504 = vld [vmem:[%s29 + $0x1] sm:$0x1]
    %v505 = vperm.slane %v504, 0
    %v506 = vmul.f32 %v503, %v505
    %v507 = vld [vmem:[%s29 + $0x2] sm:$0x1]
    %v508 = vperm.slane %v507, 0
    %v509 = vadd.f32 %v506, %v508
    %v510 = vld [vmem:[%s31] sm:$0xff]
    %v511 = vld [vmem:[%s31 + $0x8] sm:$0xff]
    %v512 = vld [vmem:[%s31 + $0x10] sm:$0xff]
    %v513 = vld [vmem:[%s31 + $0x18] sm:$0xff]
    %v514 = vld [vmem:[%s33] sm:$0x1]
    %v515 = vperm.slane %v514, 0
    %v517 = vsel %vm414, %v509, 0
    %519 = vmatpush.msra.mxu0 0.0
    %520 = vmatpush.msra.mxu0 0.0
    %521 = vmatpush.msra.mxu0 0.0
    %522 = vmatpush.msra.mxu0 0.0
    %523 = vmatpush.msra.mxu0 0.0
    %524 = vmatpush.msra.mxu0 0.0
    %525 = vmatpush.msra.mxu0 0.0
    %526 = vmatpush.msra.mxu0 0.0
    %527 = vmatpush.msra.mxu0 0.0
    %528 = vmatpush.msra.mxu0 0.0
    %529 = vmatpush.msra.mxu0 0.0
    %530 = vmatpush.msra.mxu0 0.0
    %531 = vmatpush.msra.mxu0 %v513
    %532 = vmatpush.msra.mxu0 %v512
    %533 = vmatpush.msra.mxu0 %v511
    %534 = vmatpush.msra.mxu0 %v510
    %535 = vmatmul.f32.gmra.mxu0 %v517
    %v536 = vpop.f32.mrf.mxu0
    %v537 = vadd.f32 %v515, %v536
    %538 = vdwg.mxu0
    %v539 = vmul.f32 %v537, 0.2
    %v540 = vmax.f32 %v537, %v539
    %v541 = vld [vmem:[%s33 + $0x1] sm:$0x1]
    %v542 = vperm.slane %v541, 0
    %v543 = vmul.f32 %v540, %v542
    %v544 = vld [vmem:[%s33 + $0x2] sm:$0x1]
    %v545 = vperm.slane %v544, 0
    %v546 = vadd.f32 %v543, %v545
    %v547 = vld [vmem:[%s35] sm:$0xff]
    %v548 = vld [vmem:[%s35 + $0x8] sm:$0xff]
    %v549 = vld [vmem:[%s37] sm:$0x1]
    %v550 = vperm.slane %v549, 0
    %vm551 = vcmask 130048
    %v553 = vsel %vm551, %v546, 0
    %555 = vmatpush.msra.mxu0 0.0
    %556 = vmatpush.msra.mxu0 0.0
    %557 = vmatpush.msra.mxu0 0.0
    %558 = vmatpush.msra.mxu0 0.0
    %559 = vmatpush.msra.mxu0 0.0
    %560 = vmatpush.msra.mxu0 0.0
    %561 = vmatpush.msra.mxu0 0.0
    %562 = vmatpush.msra.mxu0 0.0
    %563 = vmatpush.msra.mxu0 0.0
    %564 = vmatpush.msra.mxu0 0.0
    %565 = vmatpush.msra.mxu0 0.0
    %566 = vmatpush.msra.mxu0 0.0
    %567 = vmatpush.msra.mxu0 0.0
    %568 = vmatpush.msra.mxu0 0.0
    %569 = vmatpush.msra.mxu0 %v548
    %570 = vmatpush.msra.mxu0 %v547
    %571 = vmatmul.f32.gmra.mxu0 %v553
    %v572 = vpop.f32.mrf.mxu0
    %v573 = vadd.f32 %v550, %v572
    %574 = vdwg.mxu0
    %v575 = vmul.f32 %v573, 0.2
    %v576 = vmax.f32 %v573, %v575
    %v577 = vld [vmem:[%s37 + $0x1] sm:$0x1]
    %v578 = vperm.slane %v577, 0
    %v579 = vmul.f32 %v576, %v578
    %v580 = vld [vmem:[%s37 + $0x2] sm:$0x1]
    %v581 = vperm.slane %v580, 0
    %v582 = vadd.f32 %v579, %v581
    %v583 = vld [vmem:[%s39] sm:$0xf]
    %v584 = vld [vmem:[%s41] sm:$0xff]
    %v585 = vld [vmem:[%s41 + $0x8] sm:$0xff]
    %v586 = vld [vmem:[%s41 + $0x10] sm:$0xff]
    %v587 = vld [vmem:[%s41 + $0x18] sm:$0xff]
    %v588 = vld [vmem:[%s41 + $0x20] sm:$0xff]
    %v589 = vld [vmem:[%s41 + $0x28] sm:$0xff]
    %v590 = vld [vmem:[%s41 + $0x30] sm:$0xff]
    %v591 = vld [vmem:[%s41 + $0x38] sm:$0xff]
    %592 = vmatpush.msra.mxu0 0.0
    %593 = vmatpush.msra.mxu0 0.0
    %594 = vmatpush.msra.mxu0 0.0
    %595 = vmatpush.msra.mxu0 0.0
    %596 = vmatpush.msra.mxu0 0.0
    %597 = vmatpush.msra.mxu0 0.0
    %598 = vmatpush.msra.mxu0 0.0
    %599 = vmatpush.msra.mxu0 0.0
    %600 = vmatpush.msra.mxu0 %v591
    %601 = vmatpush.msra.mxu0 %v590
    %602 = vmatpush.msra.mxu0 %v589
    %603 = vmatpush.msra.mxu0 %v588
    %604 = vmatpush.msra.mxu0 %v587
    %605 = vmatpush.msra.mxu0 %v586
    %606 = vmatpush.msra.mxu0 %v585
    %607 = vmatpush.msra.mxu0 %v584
    %608 = vmatmul.f32.gmra.mxu0 %v311
    %v609 = vpop.f32.mrf.mxu0
    %v610 = vadd.f32 0.0, %v609
    %611 = vdwg.mxu0
    %vm612 = vcmask 31744
    %v614 = vsel %vm612, %v582, 0
    %vm616 = vcmask 1043456
    %v618 = vsel %vm616, %v583, 0
    %620 = vmatpush.msra.mxu0 0.0
    %621 = vmatpush.msra.mxu0 0.0
    %622 = vmatpush.msra.mxu0 0.0
    %623 = vmatpush.msra.mxu0 0.0
    %624 = vmatpush.msra.mxu0 0.0
    %625 = vmatpush.msra.mxu0 0.0
    %626 = vmatpush.msra.mxu0 0.0
    %627 = vmatpush.msra.mxu0 0.0
    %628 = vmatpush.msra.mxu0 0.0
    %629 = vmatpush.msra.mxu0 0.0
    %630 = vmatpush.msra.mxu0 0.0
    %631 = vmatpush.msra.mxu0 0.0
    %632 = vmatpush.msra.mxu0 0.0
    %633 = vmatpush.msra.mxu0 0.0
    %634 = vmatpush.msra.mxu0 0.0
    %635 = vmatpush.msra.mxu0 %v618
    %636 = vmatmul.f32.gmra.mxu0 %v614
    %v637 = vpop.f32.mrf.mxu0
    %v638 = vadd.f32 %v610, %v637
    %639 = vdwg.mxu0
    %v640 = vld [vmem:[%s43] sm:$0x1]
    %v641 = vperm.slane %v640, 0
    %v642 = vadd.f32 %v638, %v641
    %v643 = vmul.f32 %v642, 0.2
    %v644 = vmax.f32 %v642, %v643
    %v645 = vld [vmem:[%s43 + $0x1] sm:$0x1]
    %v646 = vperm.slane %v645, 0
    %v647 = vmul.f32 %v644, %v646
    %v648 = vld [vmem:[%s43 + $0x2] sm:$0x1]
    %v649 = vperm.slane %v648, 0
    %v650 = vadd.f32 %v647, %v649
    %v651 = vld [vmem:[%s45] sm:$0xff]
    %v652 = vld [vmem:[%s45 + $0x8] sm:$0xff]
    %v653 = vld [vmem:[%s47] sm:$0x1]
    %v654 = vperm.slane %v653, 0
    %v656 = vsel %vm551, %v650, 0
    %658 = vmatpush.msra.mxu0 0.0
    %659 = vmatpush.msra.mxu0 0.0
    %660 = vmatpush.msra.mxu0 0.0
    %661 = vmatpush.msra.mxu0 0.0
    %662 = vmatpush.msra.mxu0 0.0
    %663 = vmatpush.msra.mxu0 0.0
    %664 = vmatpush.msra.mxu0 0.0
    %665 = vmatpush.msra.mxu0 0.0
    %666 = vmatpush.msra.mxu0 0.0
    %667 = vmatpush.msra.mxu0 0.0
    %668 = vmatpush.msra.mxu0 0.0
    %669 = vmatpush.msra.mxu0 0.0
    %670 = vmatpush.msra.mxu0 0.0
    %671 = vmatpush.msra.mxu0 0.0
    %672 = vmatpush.msra.mxu0 %v652
    %673 = vmatpush.msra.mxu0 %v651
    %674 = vmatmul.f32.gmra.mxu0 %v656
    %v675 = vpop.f32.mrf.mxu0
    %v676 = vadd.f32 %v654, %v675
    %677 = vdwg.mxu0
    %v678 = vmul.f32 %v676, 0.2
    %v679 = vmax.f32 %v676, %v678
    %v680 = vld [vmem:[%s47 + $0x1] sm:$0x1]
    %v681 = vperm.slane %v680, 0
    %v682 = vmul.f32 %v679, %v681
    %v683 = vld [vmem:[%s47 + $0x2] sm:$0x1]
    %v684 = vperm.slane %v683, 0
    %v685 = vadd.f32 %v682, %v684
    %v686 = vld [vmem:[%s49] sm:$0xff]
    %v687 = vld [vmem:[%s51] sm:$0x1]
    %v688 = vperm.slane %v687, 0
    %v690 = vsel %vm475, %v685, 0
    %692 = vmatpush.msra.mxu0 0.0
    %693 = vmatpush.msra.mxu0 0.0
    %694 = vmatpush.msra.mxu0 0.0
    %695 = vmatpush.msra.mxu0 0.0
    %696 = vmatpush.msra.mxu0 0.0
    %697 = vmatpush.msra.mxu0 0.0
    %698 = vmatpush.msra.mxu0 0.0
    %699 = vmatpush.msra.mxu0 0.0
    %700 = vmatpush.msra.mxu0 0.0
    %701 = vmatpush.msra.mxu0 0.0
    %702 = vmatpush.msra.mxu0 0.0
    %703 = vmatpush.msra.mxu0 0.0
    %704 = vmatpush.msra.mxu0 0.0
    %705 = vmatpush.msra.mxu0 0.0
    %706 = vmatpush.msra.mxu0 0.0
    %707 = vmatpush.msra.mxu0 %v686
    %708 = vmatmul.f32.gmra.mxu0 %v690
    %v709 = vpop.f32.mrf.mxu0
    %v710 = vadd.f32 %v688, %v709
    %711 = vdwg.mxu0
    %v712 = vmul.f32 %v710, 0.2
    %v713 = vmax.f32 %v710, %v712
    %v714 = vld [vmem:[%s51 + $0x1] sm:$0x1]
    %v715 = vperm.slane %v714, 0
    %v716 = vmul.f32 %v713, %v715
    %v717 = vld [vmem:[%s51 + $0x2] sm:$0x1]
    %v718 = vperm.slane %v717, 0
    %v719 = vadd.f32 %v716, %v718
    %v720 = vld [vmem:[%s53] sm:$0xff]
    %v721 = vld [vmem:[%s55] sm:$0xf]
    %v723 = vsel %vm616, %v721, 0
    %725 = vmatpush.msra.mxu0 0.0
    %726 = vmatpush.msra.mxu0 0.0
    %727 = vmatpush.msra.mxu0 0.0
    %728 = vmatpush.msra.mxu0 0.0
    %729 = vmatpush.msra.mxu0 0.0
    %730 = vmatpush.msra.mxu0 0.0
    %731 = vmatpush.msra.mxu0 0.0
    %732 = vmatpush.msra.mxu0 0.0
    %733 = vmatpush.msra.mxu0 0.0
    %734 = vmatpush.msra.mxu0 0.0
    %735 = vmatpush.msra.mxu0 0.0
    %736 = vmatpush.msra.mxu0 0.0
    %737 = vmatpush.msra.mxu0 0.0
    %738 = vmatpush.msra.mxu0 0.0
    %739 = vmatpush.msra.mxu0 0.0
    %740 = vmatpush.msra.mxu0 %v723
    %741 = vmatmul.f32.gmra.mxu0 %v614
    %v742 = vpop.f32.mrf.mxu0
    %v743 = vadd.f32 0.0, %v742
    %744 = vdwg.mxu0
    %745 = vmatpush.msra.mxu0 0.0
    %746 = vmatpush.msra.mxu0 0.0
    %747 = vmatpush.msra.mxu0 0.0
    %748 = vmatpush.msra.mxu0 0.0
    %749 = vmatpush.msra.mxu0 0.0
    %750 = vmatpush.msra.mxu0 0.0
    %751 = vmatpush.msra.mxu0 0.0
    %752 = vmatpush.msra.mxu0 0.0
    %753 = vmatpush.msra.mxu0 0.0
    %754 = vmatpush.msra.mxu0 0.0
    %755 = vmatpush.msra.mxu0 0.0
    %756 = vmatpush.msra.mxu0 0.0
    %757 = vmatpush.msra.mxu0 0.0
    %758 = vmatpush.msra.mxu0 0.0
    %759 = vmatpush.msra.mxu0 0.0
    %760 = vmatpush.msra.mxu0 %v720
    %761 = vmatmul.f32.gmra.mxu0 %v477
    %v762 = vpop.f32.mrf.mxu0
    %v763 = vadd.f32 %v743, %v762
    %764 = vdwg.mxu0
    %v765 = vld [vmem:[%s57] sm:$0x3]
    %vm766 = vcmask 15360
    %v768 = vsel %vm766, %v719, 0
    %vm770 = vcmask 1041408
    %v772 = vsel %vm770, %v765, 0
    %774 = vmatpush.msra.mxu0 0.0
    %775 = vmatpush.msra.mxu0 0.0
    %776 = vmatpush.msra.mxu0 0.0
    %777 = vmatpush.msra.mxu0 0.0
    %778 = vmatpush.msra.mxu0 0.0
    %779 = vmatpush.msra.mxu0 0.0
    %780 = vmatpush.msra.mxu0 0.0
    %781 = vmatpush.msra.mxu0 0.0
    %782 = vmatpush.msra.mxu0 0.0
    %783 = vmatpush.msra.mxu0 0.0
    %784 = vmatpush.msra.mxu0 0.0
    %785 = vmatpush.msra.mxu0 0.0
    %786 = vmatpush.msra.mxu0 0.0
    %787 = vmatpush.msra.mxu0 0.0
    %788 = vmatpush.msra.mxu0 0.0
    %789 = vmatpush.msra.mxu0 %v772
    %790 = vmatmul.f32.gmra.mxu0 %v768
    %v791 = vpop.f32.mrf.mxu0
    %v792 = vadd.f32 0.0, %v791
    %793 = vdwg.mxu0
    %v794 = vadd.f32 %v763, %v792
    %v795 = vld [vmem:[%s59] sm:$0x1]
    %v797 = vperm.slane %v795, 0
    %v799 = vadd.f32 %v794, %v797
    %800 = vst [vmem:[#allocation2] sm:$0xff] %v799
    // Predicated region
    $region122: #{tpu_custom_call.1} parent=1 // pred_check
      _
    $region123: #{tpu_custom_call.1} parent=1 // pred_check_branch
      %802 = sbr.rel (0) target = $region125
    $region124: #{tpu_custom_call.1} parent=1 // pred_region
      %804 = vsyncadd [#allocation3], 0
      %s806 = sshll.u32 [#allocation2], 4
      %s807 = int_to_ptr.vmem [resolvable:$true] %s806
      %s808 = sshll.u32 %s61, 4
      %s809 = int_to_ptr.hbm [resolvable:$true] %s808
      %811 = dma.vmem_to_hbm [thread:$0]  %s807, 128, %s809, [#allocation3]
    $region125: #{tpu_custom_call.1} parent=1 // pred_fallthru
      _
    // Predicated region
    $region126: #{tpu_custom_call.1} parent=1 // pred_check
      _
    $region127: #{tpu_custom_call.1} parent=1 // pred_check_branch
      %813 = sbr.rel (0) target = $region129
    $region128: #{tpu_custom_call.1} parent=1 // pred_region
      %815 = dma.done [#allocation3], 128
    $region129: #{tpu_custom_call.1} parent=1 // pred_fallthru
      _
    %816 = vsyncpa [#allocation3], 1

</llo_original>
